<compile_context>
chip_gen: v5e
topology: v5e:2x2
jax: 0.10.0
libtpu: 0.0.40
codegen_flags: <defaults>
</compile_context>

<pallas_src>
import functools

import jax
import jax.numpy as jnp
from jax.experimental import pallas as pl
from jax.experimental.pallas import tpu as pltpu

WINDOW_SIZE = 11
SIGMA = 1.5
C1 = 0.01 ** 2
C2 = 0.03 ** 2


def gaussian_1d(window_size, sigma):
    xs = jnp.arange(window_size, dtype=jnp.float32)
    g = jnp.exp(-((xs - window_size // 2) ** 2) / (2.0 * sigma ** 2))
    return g / jnp.sum(g)


def band_matrix(n, g, pad):
    """M[i, j] = g[j - i + pad] for |j - i| <= pad else 0.  Shape (n, n).

    With zero padding, conv1d(x)[i] == sum_j M[i, j] * x[j]; columns that fall
    in the zero padding contribute nothing, so the (n, n) truncation is exact.
    """
    i = jnp.arange(n)[:, None]
    j = jnp.arange(n)[None, :]
    d = j - i + pad
    window = 2 * pad + 1
    return jnp.where((d >= 0) & (d < window),
                     g[jnp.clip(d, 0, window - 1)],
                     0.0).astype(jnp.float32)


def _ssim_kernel(a_l_ref, a_r_ref, x_ref, y_ref, o_ref, *,
                 cb, H, W, Wp, conv_dtype):
    a_l = a_l_ref[...]                                   # (H, H)
    a_r = a_r_ref[...]                                   # (Wp, Wp)
    x = x_ref[...]                                       # (cb, H, Wp) f32
    y = y_ref[...]                                       # (cb, H, Wp) f32

    # Hoisted once (broadcast_in_dim is not CSE'd by JAX).
    a_lb = jnp.broadcast_to(a_l[None], (cb, H, H))

    def gconv(v):
        """Separable 11-tap Gaussian blur (zero padding) of a (cb,H,Wp) block."""
        v = v.astype(conv_dtype)
        # rows: per-image (H, H) @ (H, Wp), batched over the cb images.
        t = jax.lax.dot_general(
            a_lb, v,
            dimension_numbers=(((2,), (1,)), ((0,), (0,))),
            preferred_element_type=jnp.float32)
        # cols: (cb, H, Wp) @ (Wp, Wp), shared band matrix.
        return jax.lax.dot_general(
            t.astype(conv_dtype), a_r,
            dimension_numbers=(((2,), (0,)), ((), ())),
            preferred_element_type=jnp.float32)

    # Five fields, convolved one at a time (no (cb*H, 5W) concatenate).
    mu1 = gconv(x)
    mu2 = gconv(y)
    mu1_sq = mu1 * mu1
    mu2_sq = mu2 * mu2
    mu1_mu2 = mu1 * mu2
    sigma1_sq = gconv(x * x) - mu1_sq
    sigma2_sq = gconv(y * y) - mu2_sq
    sigma12 = gconv(x * y) - mu1_mu2

    num = (2.0 * mu1_mu2 + C1) * (2.0 * sigma12 + C2)
    den = (mu1_sq + mu2_sq + C1) * (sigma1_sq + sigma2_sq + C2)
    ssim_map = num * pl.reciprocal(den)                  # (cb, H, Wp) f32

    # Mask out the lane padding (padded columns evaluate to ssim == 1).
    if Wp != W:
        col = jax.lax.broadcasted_iota(jnp.int32, (cb, H, Wp), 2)
        ssim_map = jnp.where(col < W, ssim_map, 0.0)

    # Per-image means scattered into lanes [0, cb) of a lane-dense (8, 128)
    # output tile (row 0 carries the values; the other rows are copies).
    row_sums = jnp.sum(ssim_map, axis=2, keepdims=True)          # (cb, H, 1)
    img_id = jax.lax.broadcasted_iota(jnp.int32, (cb, H, 128), 0)
    lane = jax.lax.broadcasted_iota(jnp.int32, (cb, H, 128), 2)
    sel = lane == img_id
    per = jnp.sum(jnp.where(sel, row_sums, 0.0), axis=1, keepdims=True)
    per = jnp.sum(per, axis=0, keepdims=True)                    # (1, 1, 128)
    o_ref[0] = jnp.broadcast_to(per[0] * (1.0 / (H * W)), (8, 128))


def _pick_cb(N, H, Wp, max_block_bytes=2 * 1024 * 1024):
    """Images per grid step: divides N, <= 128 lanes, block fits the VMEM
    budget, and keeps nb = N // cb >= 2 (even when possible) so the parallel
    grid axis can shard across v7x's two TensorCores."""
    cands = [d for d in range(1, N + 1)
             if N % d == 0 and d <= 128 and d * H * Wp * 4 <= max_block_bytes]
    if not cands:
        return 1
    even = [d for d in cands if (N // d) >= 2 and (N // d) % 2 == 0]
    multi = [d for d in cands if (N // d) >= 2]
    for pool in (even, multi, cands):
        if pool:
            return max(pool)
    return 1


def ssim_pallas(img1, img2, window_size=WINDOW_SIZE, sigma=SIGMA,
                size_average=True, conv_dtype=jnp.float32):
    """SSIM forward matching torch SSIM(window_size=11, size_average)."""
    B, C, H, W = img1.shape
    N = B * C
    pad = window_size // 2

    # Lane-align the image width; padded columns are masked in the kernel.
    Wp = ((W + 127) // 128) * 128

    g = gaussian_1d(window_size, sigma)
    a_left = band_matrix(H, g, pad).astype(conv_dtype)        # (H, H)
    a_right = band_matrix(Wp, g, pad).T.astype(conv_dtype)    # (Wp, Wp)

    px = img1.astype(jnp.float32).reshape(N, H, W)
    py = img2.astype(jnp.float32).reshape(N, H, W)
    if Wp != W:
        padw = ((0, 0), (0, 0), (0, Wp - W))
        px = jnp.pad(px, padw)
        py = jnp.pad(py, padw)

    cb = _pick_cb(N, H, Wp)
    nb = N // cb

    # Working-set-based VMEM limit (default scoped limits are 16/32 MiB).
    block_bytes = cb * H * Wp * 4
    est = (4 * block_bytes                       # x, y double-buffered inputs
           + 2 * (H * H + Wp * Wp) * 4           # band matrices (2 bufs each)
           + cb * H * H * 4                      # broadcast left band
           + 12 * block_bytes                    # conv temps / mu / sigma / map
           + 2 * 8 * 128 * 4)                    # output buffers
    vmem_limit = int(min(96 * 2 ** 20, max(32 * 2 ** 20, 2 * est)))

    kernel = functools.partial(_ssim_kernel, cb=cb, H=H, W=W, Wp=Wp,
                               conv_dtype=conv_dtype)

    out = pl.pallas_call(
        kernel,
        out_shape=jax.ShapeDtypeStruct((nb, 8, 128), jnp.float32),
        grid_spec=pltpu.PrefetchScalarGridSpec(
            num_scalar_prefetch=0,
            grid=(nb,),
            in_specs=[
                pl.BlockSpec((H, H), lambda i: (0, 0)),        # constant
                pl.BlockSpec((Wp, Wp), lambda i: (0, 0)),      # constant
                pl.BlockSpec((cb, H, Wp), lambda i: (i, 0, 0)),
                pl.BlockSpec((cb, H, Wp), lambda i: (i, 0, 0)),
            ],
            out_specs=pl.BlockSpec((1, 8, 128), lambda i: (i, 0, 0)),
        ),
        compiler_params=pltpu.CompilerParams(
            dimension_semantics=("parallel",),
            vmem_limit_bytes=vmem_limit),
    )(a_left, a_right, px, py)

    per_img = out[:, 0, :cb].reshape(B, C)        # per-(b, c) ssim_map means
    if size_average:
        # ssim_map.mean() == mean of per-(b, c) means (all maps are H x W)
        return jnp.mean(per_img)
    # size_average=False: ssim_map.mean(1).mean(1).mean(1) -> per-batch mean
    return jnp.mean(per_img, axis=1)


def ssim_reference_map(img1, img2, window_size=WINDOW_SIZE, sigma=SIGMA):
    """Pure-JAX reference reproducing the PyTorch _ssim path (for checking)."""
    B, C, H, W = img1.shape
    g = gaussian_1d(window_size, sigma)
    w2d = jnp.outer(g, g)
    window = jnp.broadcast_to(w2d, (C, 1, window_size, window_size))
    pad = window_size // 2

    def conv(x):
        return jax.lax.conv_general_dilated(
            x.astype(jnp.float32), window.astype(jnp.float32),
            window_strides=(1, 1), padding=[(pad, pad), (pad, pad)],
            dimension_numbers=("NCHW", "OIHW", "NCHW"),
            feature_group_count=C,
            precision=jax.lax.Precision.HIGHEST)

    mu1 = conv(img1)
    mu2 = conv(img2)
    mu1_sq, mu2_sq, mu1_mu2 = mu1 * mu1, mu2 * mu2, mu1 * mu2
    sigma1_sq = conv(img1 * img1) - mu1_sq
    sigma2_sq = conv(img2 * img2) - mu2_sq
    sigma12 = conv(img1 * img2) - mu1_mu2
    return ((2 * mu1_mu2 + C1) * (2 * sigma12 + C2) /
            ((mu1_sq + mu2_sq + C1) * (sigma1_sq + sigma2_sq + C2)))


if __name__ == "__main__":
    key = jax.random.PRNGKey(0)
    k1, k2 = jax.random.split(key)
    B, C, H, W = 2, 4, 16, 16
    img1 = jax.random.uniform(k1, (B, C, H, W), dtype=jnp.float32)
    img2 = jax.random.uniform(k2, (B, C, H, W), dtype=jnp.float32)

    out = jax.block_until_ready(ssim_pallas(img1, img2))
    out_pb = jax.block_until_ready(ssim_pallas(img1, img2, size_average=False))

    ref_map = ssim_reference_map(img1, img2)
    ref = jnp.mean(ref_map)
    ref_pb = jnp.mean(ref_map, axis=(1, 2, 3))

    assert jnp.allclose(out, ref, rtol=1e-5, atol=1e-5), (out, ref)
    assert jnp.allclose(out_pb, ref_pb, rtol=1e-5, atol=1e-5), (out_pb, ref_pb)

    print("KERNEL_OK")
</pallas_src>

<mosaic_0001>
module attributes {stable_mosaic.version = 11 : i64} {
  func.func @_ssim_kernel(%arg0: i32, %arg1: memref<16x16xf32, #tpu.memory_space<vmem>>, %arg2: memref<128x128xf32, #tpu.memory_space<vmem>>, %arg3: memref<4x16x128xf32, #tpu.memory_space<vmem>>, %arg4: memref<4x16x128xf32, #tpu.memory_space<vmem>>, %arg5: memref<1x8x128xf32, #tpu.memory_space<vmem>>) attributes {dimension_semantics = [#tpu.dimension_semantics<parallel>], iteration_bounds = array<i64: 2>, scalar_prefetch = 0 : i64, scratch_operands = 0 : i64, tpu.core_type = #tpu.core_type<tc>, window_params = [{pipeline_mode = #tpu.pipeline_mode<synchronous>, transform_indices = @transform_0, window_bounds = array<i64: 16, 16>}, {pipeline_mode = #tpu.pipeline_mode<synchronous>, transform_indices = @transform_1, window_bounds = array<i64: 128, 128>}, {transform_indices = @transform_2, window_bounds = array<i64: 4, 16, 128>}, {transform_indices = @transform_3, window_bounds = array<i64: 4, 16, 128>}, {transform_indices = @transform_4, window_bounds = array<i64: 1, 8, 128>}]} {
    %c0 = arith.constant 0 : index
    %c0_0 = arith.constant 0 : index
    %0 = vector.load %arg1[%c0, %c0_0] : memref<16x16xf32, #tpu.memory_space<vmem>>, vector<16x16xf32>
    %c0_1 = arith.constant 0 : index
    %c0_2 = arith.constant 0 : index
    %1 = vector.load %arg2[%c0_1, %c0_2] : memref<128x128xf32, #tpu.memory_space<vmem>>, vector<128x128xf32>
    %c0_3 = arith.constant 0 : index
    %c0_4 = arith.constant 0 : index
    %c0_5 = arith.constant 0 : index
    %2 = vector.load %arg3[%c0_3, %c0_4, %c0_5] : memref<4x16x128xf32, #tpu.memory_space<vmem>>, vector<4x16x128xf32>
    %c0_6 = arith.constant 0 : index
    %c0_7 = arith.constant 0 : index
    %c0_8 = arith.constant 0 : index
    %3 = vector.load %arg4[%c0_6, %c0_7, %c0_8] : memref<4x16x128xf32, #tpu.memory_space<vmem>>, vector<4x16x128xf32>
    %4 = vector.shape_cast %0 : vector<16x16xf32> to vector<1x16x16xf32>
    %5 = vector.shape_cast %4 : vector<1x16x16xf32> to vector<1x16x16xf32>
    %6 = vector.broadcast %5 : vector<1x16x16xf32> to vector<4x16x16xf32>
    %cst = arith.constant dense<0.000000e+00> : vector<4x16x128xf32>
    %7 = tpu.matmul %6, %2, %cst {dimension_numbers = #tpu.dot_dimension_numbers<[2], [1], [1], [2], [0, 0, 0, 1, 1, 2], [0], [0]>} : vector<4x16x16xf32>, vector<4x16x128xf32>, vector<4x16x128xf32> -> vector<4x16x128xf32>
    %cst_9 = arith.constant dense<0.000000e+00> : vector<4x16x128xf32>
    %8 = tpu.matmul %7, %1, %cst_9 {dimension_numbers = #tpu.dot_dimension_numbers<[2], [0], [0, 1], [1], [0, 0, 0, 1, 1, 1], [], []>} : vector<4x16x128xf32>, vector<128x128xf32>, vector<4x16x128xf32> -> vector<4x16x128xf32>
    %cst_10 = arith.constant dense<0.000000e+00> : vector<4x16x128xf32>
    %9 = tpu.matmul %6, %3, %cst_10 {dimension_numbers = #tpu.dot_dimension_numbers<[2], [1], [1], [2], [0, 0, 0, 1, 1, 2], [0], [0]>} : vector<4x16x16xf32>, vector<4x16x128xf32>, vector<4x16x128xf32> -> vector<4x16x128xf32>
    %cst_11 = arith.constant dense<0.000000e+00> : vector<4x16x128xf32>
    %10 = tpu.matmul %9, %1, %cst_11 {dimension_numbers = #tpu.dot_dimension_numbers<[2], [0], [0, 1], [1], [0, 0, 0, 1, 1, 1], [], []>} : vector<4x16x128xf32>, vector<128x128xf32>, vector<4x16x128xf32> -> vector<4x16x128xf32>
    %11 = arith.mulf %8, %8 : vector<4x16x128xf32>
    %12 = arith.mulf %10, %10 : vector<4x16x128xf32>
    %13 = arith.mulf %8, %10 : vector<4x16x128xf32>
    %14 = arith.mulf %2, %2 : vector<4x16x128xf32>
    %cst_12 = arith.constant dense<0.000000e+00> : vector<4x16x128xf32>
    %15 = tpu.matmul %6, %14, %cst_12 {dimension_numbers = #tpu.dot_dimension_numbers<[2], [1], [1], [2], [0, 0, 0, 1, 1, 2], [0], [0]>} : vector<4x16x16xf32>, vector<4x16x128xf32>, vector<4x16x128xf32> -> vector<4x16x128xf32>
    %cst_13 = arith.constant dense<0.000000e+00> : vector<4x16x128xf32>
    %16 = tpu.matmul %15, %1, %cst_13 {dimension_numbers = #tpu.dot_dimension_numbers<[2], [0], [0, 1], [1], [0, 0, 0, 1, 1, 1], [], []>} : vector<4x16x128xf32>, vector<128x128xf32>, vector<4x16x128xf32> -> vector<4x16x128xf32>
    %17 = arith.subf %16, %11 : vector<4x16x128xf32>
    %18 = arith.mulf %3, %3 : vector<4x16x128xf32>
    %cst_14 = arith.constant dense<0.000000e+00> : vector<4x16x128xf32>
    %19 = tpu.matmul %6, %18, %cst_14 {dimension_numbers = #tpu.dot_dimension_numbers<[2], [1], [1], [2], [0, 0, 0, 1, 1, 2], [0], [0]>} : vector<4x16x16xf32>, vector<4x16x128xf32>, vector<4x16x128xf32> -> vector<4x16x128xf32>
    %cst_15 = arith.constant dense<0.000000e+00> : vector<4x16x128xf32>
    %20 = tpu.matmul %19, %1, %cst_15 {dimension_numbers = #tpu.dot_dimension_numbers<[2], [0], [0, 1], [1], [0, 0, 0, 1, 1, 1], [], []>} : vector<4x16x128xf32>, vector<128x128xf32>, vector<4x16x128xf32> -> vector<4x16x128xf32>
    %21 = arith.subf %20, %12 : vector<4x16x128xf32>
    %22 = arith.mulf %2, %3 : vector<4x16x128xf32>
    %cst_16 = arith.constant dense<0.000000e+00> : vector<4x16x128xf32>
    %23 = tpu.matmul %6, %22, %cst_16 {dimension_numbers = #tpu.dot_dimension_numbers<[2], [1], [1], [2], [0, 0, 0, 1, 1, 2], [0], [0]>} : vector<4x16x16xf32>, vector<4x16x128xf32>, vector<4x16x128xf32> -> vector<4x16x128xf32>
    %cst_17 = arith.constant dense<0.000000e+00> : vector<4x16x128xf32>
    %24 = tpu.matmul %23, %1, %cst_17 {dimension_numbers = #tpu.dot_dimension_numbers<[2], [0], [0, 1], [1], [0, 0, 0, 1, 1, 1], [], []>} : vector<4x16x128xf32>, vector<128x128xf32>, vector<4x16x128xf32> -> vector<4x16x128xf32>
    %25 = arith.subf %24, %13 : vector<4x16x128xf32>
    %cst_18 = arith.constant 2.000000e+00 : f32
    %26 = vector.broadcast %cst_18 : f32 to vector<4x16x128xf32>
    %27 = arith.mulf %26, %13 : vector<4x16x128xf32>
    %cst_19 = arith.constant 9.99999974E-5 : f32
    %28 = vector.broadcast %cst_19 : f32 to vector<4x16x128xf32>
    %29 = arith.addf %27, %28 : vector<4x16x128xf32>
    %cst_20 = arith.constant 2.000000e+00 : f32
    %30 = vector.broadcast %cst_20 : f32 to vector<4x16x128xf32>
    %31 = arith.mulf %30, %25 : vector<4x16x128xf32>
    %cst_21 = arith.constant 8.99999984E-4 : f32
    %32 = vector.broadcast %cst_21 : f32 to vector<4x16x128xf32>
    %33 = arith.addf %31, %32 : vector<4x16x128xf32>
    %34 = arith.mulf %29, %33 : vector<4x16x128xf32>
    %35 = arith.addf %11, %12 : vector<4x16x128xf32>
    %cst_22 = arith.constant 9.99999974E-5 : f32
    %36 = vector.broadcast %cst_22 : f32 to vector<4x16x128xf32>
    %37 = arith.addf %35, %36 : vector<4x16x128xf32>
    %38 = arith.addf %17, %21 : vector<4x16x128xf32>
    %cst_23 = arith.constant 8.99999984E-4 : f32
    %39 = vector.broadcast %cst_23 : f32 to vector<4x16x128xf32>
    %40 = arith.addf %38, %39 : vector<4x16x128xf32>
    %41 = arith.mulf %37, %40 : vector<4x16x128xf32>
    %42 = tpu.reciprocal %41 : vector<4x16x128xf32> -> vector<4x16x128xf32>
    %43 = arith.mulf %34, %42 : vector<4x16x128xf32>
    %44 = tpu.iota {dimensions = array<i32: 2>} : vector<4x16x128xi32>
    %c16_i32 = arith.constant 16 : i32
    %45 = vector.broadcast %c16_i32 : i32 to vector<4x16x128xi32>
    %46 = arith.cmpi slt, %44, %45 : vector<4x16x128xi32>
    %cst_24 = arith.constant 0.000000e+00 : f32
    %47 = vector.broadcast %cst_24 : f32 to vector<4x16x128xf32>
    %48 = arith.select %46, %43, %47 : vector<4x16x128xi1>, vector<4x16x128xf32>
    %cst_25 = arith.constant dense<0.000000e+00> : vector<4x16xf32>
    %49 = vector.multi_reduction <add>, %48, %cst_25 [2] : vector<4x16x128xf32> to vector<4x16xf32>
    %50 = vector.shape_cast %49 : vector<4x16xf32> to vector<4x16x1xf32>
    %51 = tpu.iota {dimensions = array<i32: 0>} : vector<4x16x128xi32>
    %52 = tpu.iota {dimensions = array<i32: 2>} : vector<4x16x128xi32>
    %53 = arith.cmpi eq, %52, %51 : vector<4x16x128xi32>
    %cst_26 = arith.constant 0.000000e+00 : f32
    %54 = vector.shape_cast %50 : vector<4x16x1xf32> to vector<4x16x1xf32>
    %55 = vector.broadcast %54 : vector<4x16x1xf32> to vector<4x16x128xf32>
    %56 = vector.broadcast %cst_26 : f32 to vector<4x16x128xf32>
    %57 = arith.select %53, %55, %56 : vector<4x16x128xi1>, vector<4x16x128xf32>
    %cst_27 = arith.constant dense<0.000000e+00> : vector<4x128xf32>
    %58 = vector.multi_reduction <add>, %57, %cst_27 [1] : vector<4x16x128xf32> to vector<4x128xf32>
    %59 = vector.shape_cast %58 : vector<4x128xf32> to vector<4x1x128xf32>
    %cst_28 = arith.constant dense<0.000000e+00> : vector<1x128xf32>
    %60 = vector.multi_reduction <add>, %59, %cst_28 [0] : vector<4x1x128xf32> to vector<1x128xf32>
    %61 = vector.shape_cast %60 : vector<1x128xf32> to vector<1x1x128xf32>
    %62 = vector.shape_cast %61 : vector<1x1x128xf32> to vector<1x128xf32>
    %cst_29 = arith.constant 3.906250e-03 : f32
    %63 = vector.broadcast %cst_29 : f32 to vector<1x128xf32>
    %64 = arith.mulf %62, %63 : vector<1x128xf32>
    %65 = vector.shape_cast %64 : vector<1x128xf32> to vector<1x128xf32>
    %66 = vector.broadcast %65 : vector<1x128xf32> to vector<8x128xf32>
    %c0_30 = arith.constant 0 : index
    %c0_31 = arith.constant 0 : index
    %c0_32 = arith.constant 0 : index
    %67 = vector.load %arg5[%c0_30, %c0_31, %c0_32] : memref<1x8x128xf32, #tpu.memory_space<vmem>>, vector<1x8x128xf32>
    %68 = vector.shape_cast %67 : vector<1x8x128xf32> to vector<8x128xf32>
    %69 = vector.shape_cast %66 : vector<8x128xf32> to vector<1x8x128xf32>
    tpu.vector_store %arg5[%c0_30, %c0_31, %c0_32], %69 {strides = array<i32>} : memref<1x8x128xf32, #tpu.memory_space<vmem>>, vector<1x8x128xf32>,
    return
  }
  func.func @transform_0(%arg0: i32) -> (i32, i32) {
    %c0_i32 = arith.constant 0 : i32
    %c0_i32_0 = arith.constant 0 : i32
    %c0_i32_1 = arith.constant 0 : i32
    return %c0_i32, %c0_i32_0 : i32, i32
  }
  func.func @transform_1(%arg0: i32) -> (i32, i32) {
    %c0_i32 = arith.constant 0 : i32
    %c0_i32_0 = arith.constant 0 : i32
    %c0_i32_1 = arith.constant 0 : i32
    return %c0_i32, %c0_i32_0 : i32, i32
  }
  func.func @transform_2(%arg0: i32) -> (i32, i32, i32) {
    %c0_i32 = arith.constant 0 : i32
    %c0_i32_0 = arith.constant 0 : i32
    %c0_i32_1 = arith.constant 0 : i32
    return %arg0, %c0_i32, %c0_i32_0 : i32, i32, i32
  }
  func.func @transform_3(%arg0: i32) -> (i32, i32, i32) {
    %c0_i32 = arith.constant 0 : i32
    %c0_i32_0 = arith.constant 0 : i32
    %c0_i32_1 = arith.constant 0 : i32
    return %arg0, %c0_i32, %c0_i32_0 : i32, i32, i32
  }
  func.func @transform_4(%arg0: i32) -> (i32, i32, i32) {
    %c0_i32 = arith.constant 0 : i32
    %c0_i32_0 = arith.constant 0 : i32
    %c0_i32_1 = arith.constant 0 : i32
    return %arg0, %c0_i32, %c0_i32_0 : i32, i32, i32
  }
}

</mosaic_0001>

<llo_original>
// kernel: tpu_custom_call.1
$region0: #{tpu_custom_call.1}
  #allocation0 [shape = 'u32[]', space=smem, size = 0x4, offset = 0x4, fixed_abs, tag = 'smem constant byte address 0x4 - core index']
  #allocation1 [shape = 'u32[72,128]{1,0:T(1,128)}', space=vmem, size = 0x9000, scoped, tag = 'internal scratch']
  %s0 = inlined_call_operand.hbm [shape: f32[16,16], index: 0, kind: input, shape index: {}]
  %s1 = inlined_call_operand.hbm [shape: f32[128,128], index: 1, kind: input, shape index: {}]
  %s2 = inlined_call_operand.hbm [shape: f32[8,16,128], index: 2, kind: input, shape index: {}]
  %s3 = inlined_call_operand.hbm [shape: f32[8,16,128], index: 3, kind: input, shape index: {}]
  %s4 = inlined_call_operand.hbm [shape: f32[2,8,128], index: 4, kind: output, shape index: {}]
  %s5 = sld [smem:[#allocation0]]
  $region65: #{tpu_custom_call.1} parent=0
    _
  %s7 = ssub.s32 1, %s5
  %s8 = scalar_select 0, %s7, %s5
  $region1: #{tpu_custom_call.1} parent=0
    #allocation2 [shape = 'u8[8192]{0}', space=vmem, size = 0x2000, scoped, tag = 'input window, operand 0, single buffered']
    #allocation3 [shape = 's32[2]{0}', space=sflag, size = 0x8, scoped, tag = 'scoped memory for tpu_custom_call.1']
    #allocation4 [shape = 's32[2]{0}', space=sflag, size = 0x8, scoped, tag = 'scoped memory for tpu_custom_call.1']
    #allocation5 [shape = 'u8[65536]{0}', space=vmem, size = 0x10000, scoped, tag = 'input window, operand 1, single buffered']
    #allocation6 [shape = 's32[1]{0}', space=sflag, size = 0x4, scoped, tag = 'scoped memory for tpu_custom_call.1']
    #allocation7 [shape = 'u8[65536]{0}', space=vmem, size = 0x10000, scoped, tag = 'input window, operand 2']
    #allocation8 [shape = 'u8[65536]{0}', space=vmem, size = 0x10000, scoped, tag = 'input window, operand 3']
    #allocation9 [shape = 'u8[8192]{0}', space=vmem, size = 0x2000, scoped, tag = 'output window, operand 0']
    %9 = vsyncpa [#allocation3], 0
    %10 = vsyncpa [#allocation6], 0
    %11 = vsyncpa [#allocation4], 0
    %s12 = scalar_lea.sflag [#allocation4], 1
    %13 = vsyncpa %s12, 0
    loop: start=0, step=1, limit=4
    $region2: #{tpu_custom_call.1} parent=1 // loop_pre_header
      _
    $region3: #{tpu_custom_call.1} parent=1 // loop_header
      %s15 = sphi 0, %s19
      %p16 = scmp.ge.s32.totalorder %s15, 4
      %s23 = sphi 0, %s23
      %s25 = sphi 0, %s23
      %s26 = sphi 0, %s25
      %s40 = sphi 0, %s26
      %s44 = sphi 0, %s44
      %s46 = sphi 0, %s44
      %s47 = sphi 0, %s46
      %s61 = sphi 0, %s47
      %s67 = sphi 0, %s69
      %s70 = sphi 0, %s67
      %s71 = sphi 0, %s70
      %s87 = sphi 0, %s71
      %s93 = sphi 0, %s95
      %s96 = sphi 0, %s93
      %s97 = sphi 0, %s96
      %s113 = sphi 0, %s97
      %s119 = sphi 0, %s121
      %s122 = sphi 0, %s119
      %s123 = sphi 0, %s122
      %s139 = sphi 0, %s123
    $region4: #{tpu_custom_call.1} parent=1 // loop_header_branch
      %18 = sbr.rel (%p16) target = $region8
    $region5: #{tpu_custom_call.1} parent=1 // loop_body
      %s20 = ssub.s32 %s15, 1
      %s21 = ssub.s32 %s15, 2
      %s22 = sadd.s32 %s15, 1
      %s24 = sadd.s32 %s23, 1
      %p27 = scmp.eq.s32.totalorder %s15, 1
      %p28 = scmp.ne.s32.totalorder %s23, %s25
      %p29 = scmp.eq.s32.totalorder %s15, 0
      %p30 = por %p28, %p29
      %p31 = scmp.ne.s32.totalorder %s23, %s25
      %p32 = scmp.eq.s32.totalorder %s20, 1
      %p33 = por %p31, %p32
      %p34 = scmp.ne.s32.totalorder %s25, %s26
      %p35 = scmp.eq.s32.totalorder %s20, 0
      %p36 = por %p34, %p35
      %p37 = scmp.ne.s32.totalorder %s25, %s26
      %p38 = scmp.eq.s32.totalorder %s21, 1
      %p39 = por %p37, %p38
      %p41 = scmp.ne.s32.totalorder %s26, %s40
      %p42 = scmp.eq.s32.totalorder %s21, 0
      %p43 = por %p41, %p42
      %s45 = sadd.s32 %s44, 1
      %p48 = scmp.eq.s32.totalorder %s15, 1
      %p49 = scmp.ne.s32.totalorder %s44, %s46
      %p50 = scmp.eq.s32.totalorder %s15, 0
      %p51 = por %p49, %p50
      %p52 = scmp.ne.s32.totalorder %s44, %s46
      %p53 = scmp.eq.s32.totalorder %s20, 1
      %p54 = por %p52, %p53
      %p55 = scmp.ne.s32.totalorder %s46, %s47
      %p56 = scmp.eq.s32.totalorder %s20, 0
      %p57 = por %p55, %p56
      %p58 = scmp.ne.s32.totalorder %s46, %s47
      %p59 = scmp.eq.s32.totalorder %s21, 1
      %p60 = por %p58, %p59
      %p62 = scmp.ne.s32.totalorder %s47, %s61
      %p63 = scmp.eq.s32.totalorder %s21, 0
      %p64 = por %p62, %p63
      %s65 = ssub.s32 %s15, %s22
      %p66 = scmp.eq.s32.totalorder %s65, 0
      %s68 = sadd.s32 %s67, 1
      %s69 = scalar_select %p66, %s67, %s68
      %p72 = pneg %p66
      %p73 = scmp.eq.s32.totalorder %s15, 1
      %p74 = por %p72, %p73
      %p75 = scmp.ne.s32.totalorder %s67, %s70
      %p76 = scmp.eq.s32.totalorder %s15, 0
      %p77 = por %p75, %p76
      %p78 = scmp.ne.s32.totalorder %s67, %s70
      %p79 = scmp.eq.s32.totalorder %s20, 1
      %p80 = por %p78, %p79
      %p81 = scmp.ne.s32.totalorder %s70, %s71
      %p82 = scmp.eq.s32.totalorder %s20, 0
      %p83 = por %p81, %p82
      %p84 = scmp.ne.s32.totalorder %s70, %s71
      %p85 = scmp.eq.s32.totalorder %s21, 1
      %p86 = por %p84, %p85
      %p88 = scmp.ne.s32.totalorder %s71, %s87
      %p89 = scmp.eq.s32.totalorder %s21, 0
      %p90 = por %p88, %p89
      %s91 = ssub.s32 %s15, %s22
      %p92 = scmp.eq.s32.totalorder %s91, 0
      %s94 = sadd.s32 %s93, 1
      %s95 = scalar_select %p92, %s93, %s94
      %p98 = pneg %p92
      %p99 = scmp.eq.s32.totalorder %s15, 1
      %p100 = por %p98, %p99
      %p101 = scmp.ne.s32.totalorder %s93, %s96
      %p102 = scmp.eq.s32.totalorder %s15, 0
      %p103 = por %p101, %p102
      %p104 = scmp.ne.s32.totalorder %s93, %s96
      %p105 = scmp.eq.s32.totalorder %s20, 1
      %p106 = por %p104, %p105
      %p107 = scmp.ne.s32.totalorder %s96, %s97
      %p108 = scmp.eq.s32.totalorder %s20, 0
      %p109 = por %p107, %p108
      %p110 = scmp.ne.s32.totalorder %s96, %s97
      %p111 = scmp.eq.s32.totalorder %s21, 1
      %p112 = por %p110, %p111
      %p114 = scmp.ne.s32.totalorder %s97, %s113
      %p115 = scmp.eq.s32.totalorder %s21, 0
      %p116 = por %p114, %p115
      %s117 = ssub.s32 %s15, %s22
      %p118 = scmp.eq.s32.totalorder %s117, 0
      %s120 = sadd.s32 %s119, 1
      %s121 = scalar_select %p118, %s119, %s120
      %p124 = pneg %p118
      %p125 = scmp.eq.s32.totalorder %s15, 1
      %p126 = por %p124, %p125
      %p127 = scmp.ne.s32.totalorder %s119, %s122
      %p128 = scmp.eq.s32.totalorder %s15, 0
      %p129 = por %p127, %p128
      %p130 = scmp.ne.s32.totalorder %s119, %s122
      %p131 = scmp.eq.s32.totalorder %s20, 1
      %p132 = por %p130, %p131
      %p133 = scmp.ne.s32.totalorder %s122, %s123
      %p134 = scmp.eq.s32.totalorder %s20, 0
      %p135 = por %p133, %p134
      %p136 = scmp.ne.s32.totalorder %s122, %s123
      %p137 = scmp.eq.s32.totalorder %s21, 1
      %p138 = por %p136, %p137
      %p140 = scmp.ne.s32.totalorder %s123, %s139
      %p141 = scmp.eq.s32.totalorder %s21, 0
      %p142 = por %p140, %p141
      %p143 = scmp.le.s32.totalorder 1, %s15
      %p144 = scmp.lt.s32.totalorder %s15, 3
      %p145 = pnand %p143, %p144
      %p146 = pneg %p145
      // Predicated region
      $region9: #{tpu_custom_call.1} parent=5 // pred_check
        _
      $region10: #{tpu_custom_call.1} parent=5 // pred_check_branch
        %148 = sbr.rel (%p145) target = $region12
      $region11: #{tpu_custom_call.1} parent=5 // pred_region
        %s149 = ssub.s32 %s15, 1
        // Predicated region
        $region13: #{tpu_custom_call.1} parent=11 // pred_check
          %p150 = pneg %p36
        $region14: #{tpu_custom_call.1} parent=11 // pred_check_branch
          %152 = sbr.rel (%p150) target = $region16
        $region15: #{tpu_custom_call.1} parent=11 // pred_region
          %154 = vsyncadd [#allocation3], 0
          %s155 = sshll.u32 %s0, 4
          %s156 = int_to_ptr.hbm [resolvable:$true] %s155
          %s157 = sshll.u32 [#allocation2], 4
          %s158 = int_to_ptr.vmem [resolvable:$true] %s157
          %163 = dma.hbm_to_vmem [thread:$0]  %s156, 256, %s158, [#allocation3], 128, 128, 8
        $region16: #{tpu_custom_call.1} parent=11 // pred_fallthru
          _
        // Predicated region
        $region17: #{tpu_custom_call.1} parent=11 // pred_check
          %p164 = pneg %p57
        $region18: #{tpu_custom_call.1} parent=11 // pred_check_branch
          %166 = sbr.rel (%p164) target = $region20
        $region19: #{tpu_custom_call.1} parent=11 // pred_region
          %168 = vsyncadd [#allocation6], 0
          %s169 = sshll.u32 %s1, 4
          %s170 = int_to_ptr.hbm [resolvable:$true] %s169
          %s171 = sshll.u32 [#allocation5], 4
          %s172 = int_to_ptr.vmem [resolvable:$true] %s171
          %177 = dma.hbm_to_vmem [thread:$0]  %s170, 2048, %s172, [#allocation6], 128, 128, 8
        $region20: #{tpu_custom_call.1} parent=11 // pred_fallthru
          _
      $region12: #{tpu_custom_call.1} parent=5 // pred_fallthru
        _
      %p178 = scmp.lt.s32.totalorder %s15, 2
      // Predicated region
      $region21: #{tpu_custom_call.1} parent=5 // pred_check
        %p179 = pneg %p178
      $region22: #{tpu_custom_call.1} parent=5 // pred_check_branch
        %181 = sbr.rel (%p179) target = $region24
      $region23: #{tpu_custom_call.1} parent=5 // pred_region
        // Predicated region
        $region25: #{tpu_custom_call.1} parent=23 // pred_check
          %p182 = pneg %p77
        $region26: #{tpu_custom_call.1} parent=23 // pred_check_branch
          %184 = sbr.rel (%p182) target = $region28
        $region27: #{tpu_custom_call.1} parent=23 // pred_region
          %s185 = sand.u32 %s15, 1
          %s186 = scalar_lea.sflag [#allocation3], %s185
          %s187 = sand.u32 %s67, 1
          %s188 = smul.addr %s187, 64
          %s189 = scalar_lea.vmem [#allocation7], %s188
          %s190 = smul.u32 4, %s15
          %192 = vsyncadd %s186, 0
          %s193 = smul.addr %s190, 2
          %s194 = smul.addr %s193, 8
          %s195 = scalar_lea.hbm %s2, %s194
          %s196 = sshll.u32 %s195, 4
          %s197 = int_to_ptr.hbm [resolvable:$true] %s196
          %s198 = sshll.u32 %s189, 4
          %s199 = int_to_ptr.vmem [resolvable:$true] %s198
          %204 = dma.hbm_to_vmem [thread:$0]  %s197, 1024, %s199, %s186, 128, 128, 8
        $region28: #{tpu_custom_call.1} parent=23 // pred_fallthru
          _
        // Predicated region
        $region29: #{tpu_custom_call.1} parent=23 // pred_check
          %p205 = pneg %p103
        $region30: #{tpu_custom_call.1} parent=23 // pred_check_branch
          %207 = sbr.rel (%p205) target = $region32
        $region31: #{tpu_custom_call.1} parent=23 // pred_region
          %s208 = sand.u32 %s15, 1
          %s209 = scalar_lea.sflag [#allocation3], %s208
          %s210 = sand.u32 %s93, 1
          %s211 = smul.addr %s210, 64
          %s212 = scalar_lea.vmem [#allocation8], %s211
          %s213 = smul.u32 4, %s15
          %215 = vsyncadd %s209, 0
          %s216 = smul.addr %s213, 2
          %s217 = smul.addr %s216, 8
          %s218 = scalar_lea.hbm %s3, %s217
          %s219 = sshll.u32 %s218, 4
          %s220 = int_to_ptr.hbm [resolvable:$true] %s219
          %s221 = sshll.u32 %s212, 4
          %s222 = int_to_ptr.vmem [resolvable:$true] %s221
          %227 = dma.hbm_to_vmem [thread:$0]  %s220, 1024, %s222, %s209, 128, 128, 8
        $region32: #{tpu_custom_call.1} parent=23 // pred_fallthru
          _
      $region24: #{tpu_custom_call.1} parent=5 // pred_fallthru
        _
      %p228 = scmp.le.s32.totalorder 1, %s15
      %p229 = scmp.lt.s32.totalorder %s15, 3
      %p230 = pnand %p228, %p229
      %p231 = pneg %p230
      // Predicated region
      $region33: #{tpu_custom_call.1} parent=5 // pred_check
        _
      $region34: #{tpu_custom_call.1} parent=5 // pred_check_branch
        %233 = sbr.rel (%p230) target = $region36
      $region35: #{tpu_custom_call.1} parent=5 // pred_region
        %s234 = ssub.s32 %s15, 1
        // Predicated region
        $region37: #{tpu_custom_call.1} parent=35 // pred_check
          %p235 = pneg %p36
        $region38: #{tpu_custom_call.1} parent=35 // pred_check_branch
          %237 = sbr.rel (%p235) target = $region40
        $region39: #{tpu_custom_call.1} parent=35 // pred_region
          %239 = dma.done [#allocation3], 256
        $region40: #{tpu_custom_call.1} parent=35 // pred_fallthru
          _
        // Predicated region
        $region41: #{tpu_custom_call.1} parent=35 // pred_check
          %p240 = pneg %p57
        $region42: #{tpu_custom_call.1} parent=35 // pred_check_branch
          %242 = sbr.rel (%p240) target = $region44
        $region43: #{tpu_custom_call.1} parent=35 // pred_region
          %244 = dma.done [#allocation6], 2048
        $region44: #{tpu_custom_call.1} parent=35 // pred_fallthru
          _
        %s245 = sand.u32 %s20, 1
        %s246 = scalar_lea.sflag [#allocation3], %s245
        %s247 = sand.u32 %s70, 1
        %s248 = smul.addr %s247, 64
        %s249 = scalar_lea.vmem [#allocation7], %s248
        // Predicated region
        $region45: #{tpu_custom_call.1} parent=35 // pred_check
          %p250 = pneg %p83
        $region46: #{tpu_custom_call.1} parent=35 // pred_check_branch
          %252 = sbr.rel (%p250) target = $region48
        $region47: #{tpu_custom_call.1} parent=35 // pred_region
          %254 = dma.done %s246, 1024
        $region48: #{tpu_custom_call.1} parent=35 // pred_fallthru
          _
        %s255 = sand.u32 %s20, 1
        %s256 = scalar_lea.sflag [#allocation3], %s255
        %s257 = sand.u32 %s96, 1
        %s258 = smul.addr %s257, 64
        %s259 = scalar_lea.vmem [#allocation8], %s258
        // Predicated region
        $region49: #{tpu_custom_call.1} parent=35 // pred_check
          %p260 = pneg %p109
        $region50: #{tpu_custom_call.1} parent=35 // pred_check_branch
          %262 = sbr.rel (%p260) target = $region52
        $region51: #{tpu_custom_call.1} parent=35 // pred_region
          %264 = dma.done %s256, 1024
        $region52: #{tpu_custom_call.1} parent=35 // pred_fallthru
          _
        %p265 = pneg %p36
        %p266 = pneg %p33
        %p267 = pneg %p57
        %p268 = pneg %p54
        %s269 = sand.u32 %s20, 1
        %s270 = scalar_lea.sflag [#allocation3], %s269
        %s271 = sand.u32 %s70, 1
        %s272 = smul.addr %s271, 64
        %s273 = scalar_lea.vmem [#allocation7], %s272
        %p274 = pneg %p83
        %p275 = pneg %p80
        %s276 = sand.u32 %s20, 1
        %s277 = scalar_lea.sflag [#allocation3], %s276
        %s278 = sand.u32 %s96, 1
        %s279 = smul.addr %s278, 64
        %s280 = scalar_lea.vmem [#allocation8], %s279
        %p281 = pneg %p109
        %p282 = pneg %p106
        %p283 = pneg %p135
        %p284 = pneg %p132
        %s285 = sand.u32 %s122, 1
        %s286 = scalar_lea.sflag [#allocation4], %s285
        %s287 = sand.u32 %s122, 1
        %s288 = smul.addr %s287, 8
        %s289 = scalar_lea.vmem [#allocation9], %s288
        %s290 = smul.u32 4, %s20
        %s291 = smul.u32 4, %s20
        %v292 = vld [vmem:[#allocation2] sm:$0xff]
        %v293 = vld [vmem:[#allocation2 + $0x8] sm:$0xff]
        %v294 = vld [vmem:[#allocation5] sm:$0xff]
        %v295 = vld [vmem:[#allocation5 + $0x8] sm:$0xff]
        %v296 = vld [vmem:[#allocation5 + $0x10] sm:$0xff]
        %v297 = vld [vmem:[#allocation5 + $0x18] sm:$0xff]
        %v298 = vld [vmem:[#allocation5 + $0x20] sm:$0xff]
        %v299 = vld [vmem:[#allocation5 + $0x28] sm:$0xff]
        %v300 = vld [vmem:[#allocation5 + $0x30] sm:$0xff]
        %v301 = vld [vmem:[#allocation5 + $0x38] sm:$0xff]
        %v302 = vld [vmem:[#allocation5 + $0x40] sm:$0xff]
        %v303 = vld [vmem:[#allocation5 + $0x48] sm:$0xff]
        %v304 = vld [vmem:[#allocation5 + $0x50] sm:$0xff]
        %v305 = vld [vmem:[#allocation5 + $0x58] sm:$0xff]
        %v306 = vld [vmem:[#allocation5 + $0x60] sm:$0xff]
        %v307 = vld [vmem:[#allocation5 + $0x68] sm:$0xff]
        %v308 = vld [vmem:[#allocation5 + $0x70] sm:$0xff]
        %v309 = vld [vmem:[#allocation5 + $0x78] sm:$0xff]
        %v310 = vld [vmem:[%s249] sm:$0xff]
        %v311 = vld [vmem:[%s249 + $0x8] sm:$0xff]
        %v312 = vld [vmem:[%s249 + $0x10] sm:$0xff]
        %v313 = vld [vmem:[%s249 + $0x18] sm:$0xff]
        %v314 = vld [vmem:[%s249 + $0x20] sm:$0xff]
        %v315 = vld [vmem:[%s249 + $0x28] sm:$0xff]
        %v316 = vld [vmem:[%s249 + $0x30] sm:$0xff]
        %v317 = vld [vmem:[%s249 + $0x38] sm:$0xff]
        %v318 = vld [vmem:[%s259] sm:$0xff]
        %v319 = vld [vmem:[%s259 + $0x8] sm:$0xff]
        %v320 = vld [vmem:[%s259 + $0x10] sm:$0xff]
        %v321 = vld [vmem:[%s259 + $0x18] sm:$0xff]
        %v322 = vld [vmem:[%s259 + $0x20] sm:$0xff]
        %v323 = vld [vmem:[%s259 + $0x28] sm:$0xff]
        %v324 = vld [vmem:[%s259 + $0x30] sm:$0xff]
        %v325 = vld [vmem:[%s259 + $0x38] sm:$0xff]
        %vm326 = vcmask 130048
        %v328 = vsel %vm326, %v292, 0
        %v331 = vsel %vm326, %v293, 0
        %333 = vmatpush.msra.mxu0 0.0
        %334 = vmatpush.msra.mxu0 0.0
        %335 = vmatpush.msra.mxu0 0.0
        %336 = vmatpush.msra.mxu0 0.0
        %337 = vmatpush.msra.mxu0 0.0
        %338 = vmatpush.msra.mxu0 0.0
        %339 = vmatpush.msra.mxu0 0.0
        %340 = vmatpush.msra.mxu0 0.0
        %341 = vmatpush.msra.mxu0 0.0
        %342 = vmatpush.msra.mxu0 0.0
        %343 = vmatpush.msra.mxu0 0.0
        %344 = vmatpush.msra.mxu0 0.0
        %345 = vmatpush.msra.mxu0 0.0
        %346 = vmatpush.msra.mxu0 0.0
        %347 = vmatpush.msra.mxu0 %v311
        %348 = vmatpush.msra.mxu0 %v310
        %349 = vmatmul.f32.gmra.mxu0 %v328
        %v350 = vpop.f32.mrf.mxu0
        %v351 = vadd.f32 0.0, %v350
        %352 = vmatmul.f32.gmra.mxu0 %v331
        %v353 = vpop.f32.mrf.mxu0
        %v354 = vadd.f32 0.0, %v353
        %355 = vdwg.mxu0
        %356 = vmatpush.msra.mxu0 0.0
        %357 = vmatpush.msra.mxu0 0.0
        %358 = vmatpush.msra.mxu0 0.0
        %359 = vmatpush.msra.mxu0 0.0
        %360 = vmatpush.msra.mxu0 0.0
        %361 = vmatpush.msra.mxu0 0.0
        %362 = vmatpush.msra.mxu0 0.0
        %363 = vmatpush.msra.mxu0 0.0
        %364 = vmatpush.msra.mxu0 0.0
        %365 = vmatpush.msra.mxu0 0.0
        %366 = vmatpush.msra.mxu0 0.0
        %367 = vmatpush.msra.mxu0 0.0
        %368 = vmatpush.msra.mxu0 0.0
        %369 = vmatpush.msra.mxu0 0.0
        %370 = vmatpush.msra.mxu0 %v313
        %371 = vmatpush.msra.mxu0 %v312
        %372 = vmatmul.f32.gmra.mxu0 %v328
        %v373 = vpop.f32.mrf.mxu0
        %v374 = vadd.f32 0.0, %v373
        %375 = vmatmul.f32.gmra.mxu0 %v331
        %v376 = vpop.f32.mrf.mxu0
        %v377 = vadd.f32 0.0, %v376
        %378 = vdwg.mxu0
        %379 = vmatpush.msra.mxu0 0.0
        %380 = vmatpush.msra.mxu0 0.0
        %381 = vmatpush.msra.mxu0 0.0
        %382 = vmatpush.msra.mxu0 0.0
        %383 = vmatpush.msra.mxu0 0.0
        %384 = vmatpush.msra.mxu0 0.0
        %385 = vmatpush.msra.mxu0 0.0
        %386 = vmatpush.msra.mxu0 0.0
        %387 = vmatpush.msra.mxu0 0.0
        %388 = vmatpush.msra.mxu0 0.0
        %389 = vmatpush.msra.mxu0 0.0
        %390 = vmatpush.msra.mxu0 0.0
        %391 = vmatpush.msra.mxu0 0.0
        %392 = vmatpush.msra.mxu0 0.0
        %393 = vmatpush.msra.mxu0 %v315
        %394 = vmatpush.msra.mxu0 %v314
        %395 = vmatmul.f32.gmra.mxu0 %v328
        %v396 = vpop.f32.mrf.mxu0
        %v397 = vadd.f32 0.0, %v396
        %398 = vmatmul.f32.gmra.mxu0 %v331
        %v399 = vpop.f32.mrf.mxu0
        %v400 = vadd.f32 0.0, %v399
        %401 = vdwg.mxu0
        %402 = vmatpush.msra.mxu0 0.0
        %403 = vmatpush.msra.mxu0 0.0
        %404 = vmatpush.msra.mxu0 0.0
        %405 = vmatpush.msra.mxu0 0.0
        %406 = vmatpush.msra.mxu0 0.0
        %407 = vmatpush.msra.mxu0 0.0
        %408 = vmatpush.msra.mxu0 0.0
        %409 = vmatpush.msra.mxu0 0.0
        %410 = vmatpush.msra.mxu0 0.0
        %411 = vmatpush.msra.mxu0 0.0
        %412 = vmatpush.msra.mxu0 0.0
        %413 = vmatpush.msra.mxu0 0.0
        %414 = vmatpush.msra.mxu0 0.0
        %415 = vmatpush.msra.mxu0 0.0
        %416 = vmatpush.msra.mxu0 %v317
        %417 = vmatpush.msra.mxu0 %v316
        %418 = vmatmul.f32.gmra.mxu0 %v328
        %v419 = vpop.f32.mrf.mxu0
        %v420 = vadd.f32 0.0, %v419
        %421 = vmatmul.f32.gmra.mxu0 %v331
        %v422 = vpop.f32.mrf.mxu0
        %v423 = vadd.f32 0.0, %v422
        %424 = vdwg.mxu0
        %425 = vmatpush.msra.mxu0 %v309
        %426 = vmatpush.msra.mxu0 %v308
        %427 = vmatpush.msra.mxu0 %v307
        %428 = vmatpush.msra.mxu0 %v306
        %429 = vmatpush.msra.mxu0 %v305
        %430 = vmatpush.msra.mxu0 %v304
        %431 = vmatpush.msra.mxu0 %v303
        %432 = vmatpush.msra.mxu0 %v302
        %433 = vmatpush.msra.mxu0 %v301
        %434 = vmatpush.msra.mxu0 %v300
        %435 = vmatpush.msra.mxu0 %v299
        %436 = vmatpush.msra.mxu0 %v298
        %437 = vmatpush.msra.mxu0 %v297
        %438 = vmatpush.msra.mxu0 %v296
        %439 = vmatpush.msra.mxu0 %v295
        %440 = vmatpush.msra.mxu0 %v294
        %441 = vmatmul.f32.gmra.mxu0 %v351
        %v442 = vpop.f32.mrf.mxu0
        %v443 = vadd.f32 0.0, %v442
        %444 = vmatmul.f32.gmra.mxu0 %v354
        %v445 = vpop.f32.mrf.mxu0
        %v446 = vadd.f32 0.0, %v445
        %447 = vmatmul.f32.gmra.mxu0 %v374
        %v448 = vpop.f32.mrf.mxu0
        %v449 = vadd.f32 0.0, %v448
        %450 = vmatmul.f32.gmra.mxu0 %v377
        %v451 = vpop.f32.mrf.mxu0
        %v452 = vadd.f32 0.0, %v451
        %453 = vmatmul.f32.gmra.mxu0 %v397
        %v454 = vpop.f32.mrf.mxu0
        %v455 = vadd.f32 0.0, %v454
        %456 = vmatmul.f32.gmra.mxu0 %v400
        %v457 = vpop.f32.mrf.mxu0
        %v458 = vadd.f32 0.0, %v457
        %459 = vmatmul.f32.gmra.mxu0 %v420
        %v460 = vpop.f32.mrf.mxu0
        %v461 = vadd.f32 0.0, %v460
        %462 = vmatmul.f32.gmra.mxu0 %v423
        %v463 = vpop.f32.mrf.mxu0
        %v464 = vadd.f32 0.0, %v463
        %465 = vdwg.mxu0
        %466 = vmatpush.msra.mxu0 0.0
        %467 = vmatpush.msra.mxu0 0.0
        %468 = vmatpush.msra.mxu0 0.0
        %469 = vmatpush.msra.mxu0 0.0
        %470 = vmatpush.msra.mxu0 0.0
        %471 = vmatpush.msra.mxu0 0.0
        %472 = vmatpush.msra.mxu0 0.0
        %473 = vmatpush.msra.mxu0 0.0
        %474 = vmatpush.msra.mxu0 0.0
        %475 = vmatpush.msra.mxu0 0.0
        %476 = vmatpush.msra.mxu0 0.0
        %477 = vmatpush.msra.mxu0 0.0
        %478 = vmatpush.msra.mxu0 0.0
        %479 = vmatpush.msra.mxu0 0.0
        %480 = vmatpush.msra.mxu0 %v319
        %481 = vmatpush.msra.mxu0 %v318
        %482 = vmatmul.f32.gmra.mxu0 %v328
        %v483 = vpop.f32.mrf.mxu0
        %v484 = vadd.f32 0.0, %v483
        %485 = vmatmul.f32.gmra.mxu0 %v331
        %v486 = vpop.f32.mrf.mxu0
        %v487 = vadd.f32 0.0, %v486
        %488 = vdwg.mxu0
        %489 = vmatpush.msra.mxu0 0.0
        %490 = vmatpush.msra.mxu0 0.0
        %491 = vmatpush.msra.mxu0 0.0
        %492 = vmatpush.msra.mxu0 0.0
        %493 = vmatpush.msra.mxu0 0.0
        %494 = vmatpush.msra.mxu0 0.0
        %495 = vmatpush.msra.mxu0 0.0
        %496 = vmatpush.msra.mxu0 0.0
        %497 = vmatpush.msra.mxu0 0.0
        %498 = vmatpush.msra.mxu0 0.0
        %499 = vmatpush.msra.mxu0 0.0
        %500 = vmatpush.msra.mxu0 0.0
        %501 = vmatpush.msra.mxu0 0.0
        %502 = vmatpush.msra.mxu0 0.0
        %503 = vmatpush.msra.mxu0 %v321
        %504 = vmatpush.msra.mxu0 %v320
        %505 = vmatmul.f32.gmra.mxu0 %v328
        %v506 = vpop.f32.mrf.mxu0
        %v507 = vadd.f32 0.0, %v506
        %508 = vmatmul.f32.gmra.mxu0 %v331
        %v509 = vpop.f32.mrf.mxu0
        %v510 = vadd.f32 0.0, %v509
        %511 = vdwg.mxu0
        %512 = vmatpush.msra.mxu0 0.0
        %513 = vmatpush.msra.mxu0 0.0
        %514 = vmatpush.msra.mxu0 0.0
        %515 = vmatpush.msra.mxu0 0.0
        %516 = vmatpush.msra.mxu0 0.0
        %517 = vmatpush.msra.mxu0 0.0
        %518 = vmatpush.msra.mxu0 0.0
        %519 = vmatpush.msra.mxu0 0.0
        %520 = vmatpush.msra.mxu0 0.0
        %521 = vmatpush.msra.mxu0 0.0
        %522 = vmatpush.msra.mxu0 0.0
        %523 = vmatpush.msra.mxu0 0.0
        %524 = vmatpush.msra.mxu0 0.0
        %525 = vmatpush.msra.mxu0 0.0
        %526 = vmatpush.msra.mxu0 %v323
        %527 = vmatpush.msra.mxu0 %v322
        %528 = vmatmul.f32.gmra.mxu0 %v328
        %v529 = vpop.f32.mrf.mxu0
        %v530 = vadd.f32 0.0, %v529
        %531 = vmatmul.f32.gmra.mxu0 %v331
        %v532 = vpop.f32.mrf.mxu0
        %v533 = vadd.f32 0.0, %v532
        %534 = vdwg.mxu0
        %535 = vmatpush.msra.mxu0 0.0
        %536 = vmatpush.msra.mxu0 0.0
        %537 = vmatpush.msra.mxu0 0.0
        %538 = vmatpush.msra.mxu0 0.0
        %539 = vmatpush.msra.mxu0 0.0
        %540 = vmatpush.msra.mxu0 0.0
        %541 = vmatpush.msra.mxu0 0.0
        %542 = vmatpush.msra.mxu0 0.0
        %543 = vmatpush.msra.mxu0 0.0
        %544 = vmatpush.msra.mxu0 0.0
        %545 = vmatpush.msra.mxu0 0.0
        %546 = vmatpush.msra.mxu0 0.0
        %547 = vmatpush.msra.mxu0 0.0
        %548 = vmatpush.msra.mxu0 0.0
        %549 = vmatpush.msra.mxu0 %v325
        %550 = vmatpush.msra.mxu0 %v324
        %551 = vmatmul.f32.gmra.mxu0 %v328
        %v552 = vpop.f32.mrf.mxu0
        %v553 = vadd.f32 0.0, %v552
        %554 = vmatmul.f32.gmra.mxu0 %v331
        %v555 = vpop.f32.mrf.mxu0
        %v556 = vadd.f32 0.0, %v555
        %557 = vdwg.mxu0
        %558 = vmatpush.msra.mxu0 %v309
        %559 = vmatpush.msra.mxu0 %v308
        %560 = vmatpush.msra.mxu0 %v307
        %561 = vmatpush.msra.mxu0 %v306
        %562 = vmatpush.msra.mxu0 %v305
        %563 = vmatpush.msra.mxu0 %v304
        %564 = vmatpush.msra.mxu0 %v303
        %565 = vmatpush.msra.mxu0 %v302
        %566 = vmatpush.msra.mxu0 %v301
        %567 = vmatpush.msra.mxu0 %v300
        %568 = vmatpush.msra.mxu0 %v299
        %569 = vmatpush.msra.mxu0 %v298
        %570 = vmatpush.msra.mxu0 %v297
        %571 = vmatpush.msra.mxu0 %v296
        %572 = vmatpush.msra.mxu0 %v295
        %573 = vmatpush.msra.mxu0 %v294
        %574 = vmatmul.f32.gmra.mxu0 %v484
        %v575 = vpop.f32.mrf.mxu0
        %v576 = vadd.f32 0.0, %v575
        %577 = vmatmul.f32.gmra.mxu0 %v487
        %v578 = vpop.f32.mrf.mxu0
        %v579 = vadd.f32 0.0, %v578
        %580 = vmatmul.f32.gmra.mxu0 %v507
        %v581 = vpop.f32.mrf.mxu0
        %v582 = vadd.f32 0.0, %v581
        %583 = vmatmul.f32.gmra.mxu0 %v510
        %v584 = vpop.f32.mrf.mxu0
        %v585 = vadd.f32 0.0, %v584
        %586 = vmatmul.f32.gmra.mxu0 %v530
        %v587 = vpop.f32.mrf.mxu0
        %v588 = vadd.f32 0.0, %v587
        %589 = vmatmul.f32.gmra.mxu0 %v533
        %v590 = vpop.f32.mrf.mxu0
        %v591 = vadd.f32 0.0, %v590
        %592 = vmatmul.f32.gmra.mxu0 %v553
        %v593 = vpop.f32.mrf.mxu0
        %v594 = vadd.f32 0.0, %v593
        %595 = vmatmul.f32.gmra.mxu0 %v556
        %v596 = vpop.f32.mrf.mxu0
        %v597 = vadd.f32 0.0, %v596
        %598 = vdwg.mxu0
        %v599 = vmul.f32 %v443, %v443
        %v600 = vmul.f32 %v446, %v446
        %v601 = vmul.f32 %v449, %v449
        %v602 = vmul.f32 %v452, %v452
        %v603 = vmul.f32 %v455, %v455
        %v604 = vmul.f32 %v458, %v458
        %v605 = vmul.f32 %v461, %v461
        %v606 = vmul.f32 %v464, %v464
        %v607 = vmul.f32 %v576, %v576
        %v608 = vmul.f32 %v579, %v579
        %v609 = vmul.f32 %v582, %v582
        %v610 = vmul.f32 %v585, %v585
        %v611 = vmul.f32 %v588, %v588
        %v612 = vmul.f32 %v591, %v591
        %v613 = vmul.f32 %v594, %v594
        %v614 = vmul.f32 %v597, %v597
        %v615 = vmul.f32 %v443, %v576
        %v616 = vmul.f32 %v446, %v579
        %v617 = vmul.f32 %v449, %v582
        %v618 = vmul.f32 %v452, %v585
        %v619 = vmul.f32 %v455, %v588
        %v620 = vmul.f32 %v458, %v591
        %v621 = vmul.f32 %v461, %v594
        %v622 = vmul.f32 %v464, %v597
        %v623 = vmul.f32 %v310, %v310
        %v624 = vmul.f32 %v311, %v311
        %v625 = vmul.f32 %v312, %v312
        %v626 = vmul.f32 %v313, %v313
        %v627 = vmul.f32 %v314, %v314
        %v628 = vmul.f32 %v315, %v315
        %v629 = vmul.f32 %v316, %v316
        %v630 = vmul.f32 %v317, %v317
        %631 = vmatpush.msra.mxu0 0.0
        %632 = vmatpush.msra.mxu0 0.0
        %633 = vmatpush.msra.mxu0 0.0
        %634 = vmatpush.msra.mxu0 0.0
        %635 = vmatpush.msra.mxu0 0.0
        %636 = vmatpush.msra.mxu0 0.0
        %637 = vmatpush.msra.mxu0 0.0
        %638 = vmatpush.msra.mxu0 0.0
        %639 = vmatpush.msra.mxu0 0.0
        %640 = vmatpush.msra.mxu0 0.0
        %641 = vmatpush.msra.mxu0 0.0
        %642 = vmatpush.msra.mxu0 0.0
        %643 = vmatpush.msra.mxu0 0.0
        %644 = vmatpush.msra.mxu0 0.0
        %645 = vmatpush.msra.mxu0 %v624
        %646 = vmatpush.msra.mxu0 %v623
        %647 = vmatmul.f32.gmra.mxu0 %v328
        %v648 = vpop.f32.mrf.mxu0
        %v649 = vadd.f32 0.0, %v648
        %650 = vmatmul.f32.gmra.mxu0 %v331
        %v651 = vpop.f32.mrf.mxu0
        %v652 = vadd.f32 0.0, %v651
        %653 = vdwg.mxu0
        %654 = vmatpush.msra.mxu0 0.0
        %655 = vmatpush.msra.mxu0 0.0
        %656 = vmatpush.msra.mxu0 0.0
        %657 = vmatpush.msra.mxu0 0.0
        %658 = vmatpush.msra.mxu0 0.0
        %659 = vmatpush.msra.mxu0 0.0
        %660 = vmatpush.msra.mxu0 0.0
        %661 = vmatpush.msra.mxu0 0.0
        %662 = vmatpush.msra.mxu0 0.0
        %663 = vmatpush.msra.mxu0 0.0
        %664 = vmatpush.msra.mxu0 0.0
        %665 = vmatpush.msra.mxu0 0.0
        %666 = vmatpush.msra.mxu0 0.0
        %667 = vmatpush.msra.mxu0 0.0
        %668 = vmatpush.msra.mxu0 %v626
        %669 = vmatpush.msra.mxu0 %v625
        %670 = vmatmul.f32.gmra.mxu0 %v328
        %v671 = vpop.f32.mrf.mxu0
        %v672 = vadd.f32 0.0, %v671
        %673 = vmatmul.f32.gmra.mxu0 %v331
        %v674 = vpop.f32.mrf.mxu0
        %v675 = vadd.f32 0.0, %v674
        %676 = vdwg.mxu0
        %677 = vmatpush.msra.mxu0 0.0
        %678 = vmatpush.msra.mxu0 0.0
        %679 = vmatpush.msra.mxu0 0.0
        %680 = vmatpush.msra.mxu0 0.0
        %681 = vmatpush.msra.mxu0 0.0
        %682 = vmatpush.msra.mxu0 0.0
        %683 = vmatpush.msra.mxu0 0.0
        %684 = vmatpush.msra.mxu0 0.0
        %685 = vmatpush.msra.mxu0 0.0
        %686 = vmatpush.msra.mxu0 0.0
        %687 = vmatpush.msra.mxu0 0.0
        %688 = vmatpush.msra.mxu0 0.0
        %689 = vmatpush.msra.mxu0 0.0
        %690 = vmatpush.msra.mxu0 0.0
        %691 = vmatpush.msra.mxu0 %v628
        %692 = vmatpush.msra.mxu0 %v627
        %693 = vmatmul.f32.gmra.mxu0 %v328
        %v694 = vpop.f32.mrf.mxu0
        %v695 = vadd.f32 0.0, %v694
        %696 = vmatmul.f32.gmra.mxu0 %v331
        %v697 = vpop.f32.mrf.mxu0
        %v698 = vadd.f32 0.0, %v697
        %699 = vdwg.mxu0
        %700 = vmatpush.msra.mxu0 0.0
        %701 = vmatpush.msra.mxu0 0.0
        %702 = vmatpush.msra.mxu0 0.0
        %703 = vmatpush.msra.mxu0 0.0
        %704 = vmatpush.msra.mxu0 0.0
        %705 = vmatpush.msra.mxu0 0.0
        %706 = vmatpush.msra.mxu0 0.0
        %707 = vmatpush.msra.mxu0 0.0
        %708 = vmatpush.msra.mxu0 0.0
        %709 = vmatpush.msra.mxu0 0.0
        %710 = vmatpush.msra.mxu0 0.0
        %711 = vmatpush.msra.mxu0 0.0
        %712 = vmatpush.msra.mxu0 0.0
        %713 = vmatpush.msra.mxu0 0.0
        %714 = vmatpush.msra.mxu0 %v630
        %715 = vmatpush.msra.mxu0 %v629
        %716 = vmatmul.f32.gmra.mxu0 %v328
        %v717 = vpop.f32.mrf.mxu0
        %v718 = vadd.f32 0.0, %v717
        %719 = vmatmul.f32.gmra.mxu0 %v331
        %v720 = vpop.f32.mrf.mxu0
        %v721 = vadd.f32 0.0, %v720
        %722 = vdwg.mxu0
        %723 = vmatpush.msra.mxu0 %v309
        %724 = vmatpush.msra.mxu0 %v308
        %725 = vmatpush.msra.mxu0 %v307
        %726 = vmatpush.msra.mxu0 %v306
        %727 = vmatpush.msra.mxu0 %v305
        %728 = vmatpush.msra.mxu0 %v304
        %729 = vmatpush.msra.mxu0 %v303
        %730 = vmatpush.msra.mxu0 %v302
        %731 = vmatpush.msra.mxu0 %v301
        %732 = vmatpush.msra.mxu0 %v300
        %733 = vmatpush.msra.mxu0 %v299
        %734 = vmatpush.msra.mxu0 %v298
        %735 = vmatpush.msra.mxu0 %v297
        %736 = vmatpush.msra.mxu0 %v296
        %737 = vmatpush.msra.mxu0 %v295
        %738 = vmatpush.msra.mxu0 %v294
        %739 = vmatmul.f32.gmra.mxu0 %v649
        %v740 = vpop.f32.mrf.mxu0
        %v741 = vadd.f32 0.0, %v740
        %742 = vmatmul.f32.gmra.mxu0 %v652
        %v743 = vpop.f32.mrf.mxu0
        %v744 = vadd.f32 0.0, %v743
        %745 = vmatmul.f32.gmra.mxu0 %v672
        %v746 = vpop.f32.mrf.mxu0
        %v747 = vadd.f32 0.0, %v746
        %748 = vmatmul.f32.gmra.mxu0 %v675
        %v749 = vpop.f32.mrf.mxu0
        %v750 = vadd.f32 0.0, %v749
        %751 = vmatmul.f32.gmra.mxu0 %v695
        %v752 = vpop.f32.mrf.mxu0
        %v753 = vadd.f32 0.0, %v752
        %754 = vmatmul.f32.gmra.mxu0 %v698
        %v755 = vpop.f32.mrf.mxu0
        %v756 = vadd.f32 0.0, %v755
        %757 = vmatmul.f32.gmra.mxu0 %v718
        %v758 = vpop.f32.mrf.mxu0
        %v759 = vadd.f32 0.0, %v758
        %760 = vmatmul.f32.gmra.mxu0 %v721
        %v761 = vpop.f32.mrf.mxu0
        %v762 = vadd.f32 0.0, %v761
        %763 = vdwg.mxu0
        %v764 = vsub.f32 %v741, %v599
        %v765 = vsub.f32 %v744, %v600
        %v766 = vsub.f32 %v747, %v601
        %v767 = vsub.f32 %v750, %v602
        %v768 = vsub.f32 %v753, %v603
        %v769 = vsub.f32 %v756, %v604
        %v770 = vsub.f32 %v759, %v605
        %v771 = vsub.f32 %v762, %v606
        %v772 = vmul.f32 %v318, %v318
        %v773 = vmul.f32 %v319, %v319
        %v774 = vmul.f32 %v320, %v320
        %v775 = vmul.f32 %v321, %v321
        %v776 = vmul.f32 %v322, %v322
        %v777 = vmul.f32 %v323, %v323
        %v778 = vmul.f32 %v324, %v324
        %v779 = vmul.f32 %v325, %v325
        %780 = vmatpush.msra.mxu0 0.0
        %781 = vmatpush.msra.mxu0 0.0
        %782 = vmatpush.msra.mxu0 0.0
        %783 = vmatpush.msra.mxu0 0.0
        %784 = vmatpush.msra.mxu0 0.0
        %785 = vmatpush.msra.mxu0 0.0
        %786 = vmatpush.msra.mxu0 0.0
        %787 = vmatpush.msra.mxu0 0.0
        %788 = vmatpush.msra.mxu0 0.0
        %789 = vmatpush.msra.mxu0 0.0
        %790 = vmatpush.msra.mxu0 0.0
        %791 = vmatpush.msra.mxu0 0.0
        %792 = vmatpush.msra.mxu0 0.0
        %793 = vmatpush.msra.mxu0 0.0
        %794 = vmatpush.msra.mxu0 %v773
        %795 = vmatpush.msra.mxu0 %v772
        %796 = vmatmul.f32.gmra.mxu0 %v328
        %v797 = vpop.f32.mrf.mxu0
        %v798 = vadd.f32 0.0, %v797
        %799 = vmatmul.f32.gmra.mxu0 %v331
        %v800 = vpop.f32.mrf.mxu0
        %v801 = vadd.f32 0.0, %v800
        %802 = vdwg.mxu0
        %803 = vmatpush.msra.mxu0 0.0
        %804 = vmatpush.msra.mxu0 0.0
        %805 = vmatpush.msra.mxu0 0.0
        %806 = vmatpush.msra.mxu0 0.0
        %807 = vmatpush.msra.mxu0 0.0
        %808 = vmatpush.msra.mxu0 0.0
        %809 = vmatpush.msra.mxu0 0.0
        %810 = vmatpush.msra.mxu0 0.0
        %811 = vmatpush.msra.mxu0 0.0
        %812 = vmatpush.msra.mxu0 0.0
        %813 = vmatpush.msra.mxu0 0.0
        %814 = vmatpush.msra.mxu0 0.0
        %815 = vmatpush.msra.mxu0 0.0
        %816 = vmatpush.msra.mxu0 0.0
        %817 = vmatpush.msra.mxu0 %v775
        %818 = vmatpush.msra.mxu0 %v774
        %819 = vmatmul.f32.gmra.mxu0 %v328
        %v820 = vpop.f32.mrf.mxu0
        %v821 = vadd.f32 0.0, %v820
        %822 = vmatmul.f32.gmra.mxu0 %v331
        %v823 = vpop.f32.mrf.mxu0
        %v824 = vadd.f32 0.0, %v823
        %825 = vdwg.mxu0
        %826 = vmatpush.msra.mxu0 0.0
        %827 = vmatpush.msra.mxu0 0.0
        %828 = vmatpush.msra.mxu0 0.0
        %829 = vmatpush.msra.mxu0 0.0
        %830 = vmatpush.msra.mxu0 0.0
        %831 = vmatpush.msra.mxu0 0.0
        %832 = vmatpush.msra.mxu0 0.0
        %833 = vmatpush.msra.mxu0 0.0
        %834 = vmatpush.msra.mxu0 0.0
        %835 = vmatpush.msra.mxu0 0.0
        %836 = vmatpush.msra.mxu0 0.0
        %837 = vmatpush.msra.mxu0 0.0
        %838 = vmatpush.msra.mxu0 0.0
        %839 = vmatpush.msra.mxu0 0.0
        %840 = vmatpush.msra.mxu0 %v777
        %841 = vmatpush.msra.mxu0 %v776
        %842 = vmatmul.f32.gmra.mxu0 %v328
        %v843 = vpop.f32.mrf.mxu0
        %v844 = vadd.f32 0.0, %v843
        %845 = vmatmul.f32.gmra.mxu0 %v331
        %v846 = vpop.f32.mrf.mxu0
        %v847 = vadd.f32 0.0, %v846
        %848 = vdwg.mxu0
        %849 = vmatpush.msra.mxu0 0.0
        %850 = vmatpush.msra.mxu0 0.0
        %851 = vmatpush.msra.mxu0 0.0
        %852 = vmatpush.msra.mxu0 0.0
        %853 = vmatpush.msra.mxu0 0.0
        %854 = vmatpush.msra.mxu0 0.0
        %855 = vmatpush.msra.mxu0 0.0
        %856 = vmatpush.msra.mxu0 0.0
        %857 = vmatpush.msra.mxu0 0.0
        %858 = vmatpush.msra.mxu0 0.0
        %859 = vmatpush.msra.mxu0 0.0
        %860 = vmatpush.msra.mxu0 0.0
        %861 = vmatpush.msra.mxu0 0.0
        %862 = vmatpush.msra.mxu0 0.0
        %863 = vmatpush.msra.mxu0 %v779
        %864 = vmatpush.msra.mxu0 %v778
        %865 = vmatmul.f32.gmra.mxu0 %v328
        %v866 = vpop.f32.mrf.mxu0
        %v867 = vadd.f32 0.0, %v866
        %868 = vmatmul.f32.gmra.mxu0 %v331
        %v869 = vpop.f32.mrf.mxu0
        %v870 = vadd.f32 0.0, %v869
        %871 = vdwg.mxu0
        %872 = vmatpush.msra.mxu0 %v309
        %873 = vmatpush.msra.mxu0 %v308
        %874 = vmatpush.msra.mxu0 %v307
        %875 = vmatpush.msra.mxu0 %v306
        %876 = vmatpush.msra.mxu0 %v305
        %877 = vmatpush.msra.mxu0 %v304
        %878 = vmatpush.msra.mxu0 %v303
        %879 = vmatpush.msra.mxu0 %v302
        %880 = vmatpush.msra.mxu0 %v301
        %881 = vmatpush.msra.mxu0 %v300
        %882 = vmatpush.msra.mxu0 %v299
        %883 = vmatpush.msra.mxu0 %v298
        %884 = vmatpush.msra.mxu0 %v297
        %885 = vmatpush.msra.mxu0 %v296
        %886 = vmatpush.msra.mxu0 %v295
        %887 = vmatpush.msra.mxu0 %v294
        %888 = vmatmul.f32.gmra.mxu0 %v798
        %v889 = vpop.f32.mrf.mxu0
        %v890 = vadd.f32 0.0, %v889
        %891 = vmatmul.f32.gmra.mxu0 %v801
        %v892 = vpop.f32.mrf.mxu0
        %v893 = vadd.f32 0.0, %v892
        %894 = vmatmul.f32.gmra.mxu0 %v821
        %v895 = vpop.f32.mrf.mxu0
        %v896 = vadd.f32 0.0, %v895
        %897 = vmatmul.f32.gmra.mxu0 %v824
        %v898 = vpop.f32.mrf.mxu0
        %v899 = vadd.f32 0.0, %v898
        %900 = vmatmul.f32.gmra.mxu0 %v844
        %v901 = vpop.f32.mrf.mxu0
        %v902 = vadd.f32 0.0, %v901
        %903 = vmatmul.f32.gmra.mxu0 %v847
        %v904 = vpop.f32.mrf.mxu0
        %v905 = vadd.f32 0.0, %v904
        %906 = vmatmul.f32.gmra.mxu0 %v867
        %v907 = vpop.f32.mrf.mxu0
        %v908 = vadd.f32 0.0, %v907
        %909 = vmatmul.f32.gmra.mxu0 %v870
        %v910 = vpop.f32.mrf.mxu0
        %v911 = vadd.f32 0.0, %v910
        %912 = vdwg.mxu0
        %v913 = vsub.f32 %v890, %v607
        %v914 = vsub.f32 %v893, %v608
        %v915 = vsub.f32 %v896, %v609
        %v916 = vsub.f32 %v899, %v610
        %v917 = vsub.f32 %v902, %v611
        %v918 = vsub.f32 %v905, %v612
        %v919 = vsub.f32 %v908, %v613
        %v920 = vsub.f32 %v911, %v614
        %v921 = vmul.f32 %v310, %v318
        %v922 = vmul.f32 %v311, %v319
        %v923 = vmul.f32 %v312, %v320
        %v924 = vmul.f32 %v313, %v321
        %v925 = vmul.f32 %v314, %v322
        %v926 = vmul.f32 %v315, %v323
        %v927 = vmul.f32 %v316, %v324
        %v928 = vmul.f32 %v317, %v325
        %929 = vmatpush.msra.mxu0 0.0
        %930 = vmatpush.msra.mxu0 0.0
        %931 = vmatpush.msra.mxu0 0.0
        %932 = vmatpush.msra.mxu0 0.0
        %933 = vmatpush.msra.mxu0 0.0
        %934 = vmatpush.msra.mxu0 0.0
        %935 = vmatpush.msra.mxu0 0.0
        %936 = vmatpush.msra.mxu0 0.0
        %937 = vmatpush.msra.mxu0 0.0
        %938 = vmatpush.msra.mxu0 0.0
        %939 = vmatpush.msra.mxu0 0.0
        %940 = vmatpush.msra.mxu0 0.0
        %941 = vmatpush.msra.mxu0 0.0
        %942 = vmatpush.msra.mxu0 0.0
        %943 = vmatpush.msra.mxu0 %v922
        %944 = vmatpush.msra.mxu0 %v921
        %945 = vmatmul.f32.gmra.mxu0 %v328
        %v946 = vpop.f32.mrf.mxu0
        %v947 = vadd.f32 0.0, %v946
        %948 = vmatmul.f32.gmra.mxu0 %v331
        %v949 = vpop.f32.mrf.mxu0
        %v950 = vadd.f32 0.0, %v949
        %951 = vdwg.mxu0
        %952 = vmatpush.msra.mxu0 0.0
        %953 = vmatpush.msra.mxu0 0.0
        %954 = vmatpush.msra.mxu0 0.0
        %955 = vmatpush.msra.mxu0 0.0
        %956 = vmatpush.msra.mxu0 0.0
        %957 = vmatpush.msra.mxu0 0.0
        %958 = vmatpush.msra.mxu0 0.0
        %959 = vmatpush.msra.mxu0 0.0
        %960 = vmatpush.msra.mxu0 0.0
        %961 = vmatpush.msra.mxu0 0.0
        %962 = vmatpush.msra.mxu0 0.0
        %963 = vmatpush.msra.mxu0 0.0
        %964 = vmatpush.msra.mxu0 0.0
        %965 = vmatpush.msra.mxu0 0.0
        %966 = vmatpush.msra.mxu0 %v924
        %967 = vmatpush.msra.mxu0 %v923
        %968 = vmatmul.f32.gmra.mxu0 %v328
        %v969 = vpop.f32.mrf.mxu0
        %v970 = vadd.f32 0.0, %v969
        %971 = vmatmul.f32.gmra.mxu0 %v331
        %v972 = vpop.f32.mrf.mxu0
        %v973 = vadd.f32 0.0, %v972
        %974 = vdwg.mxu0
        %975 = vmatpush.msra.mxu0 0.0
        %976 = vmatpush.msra.mxu0 0.0
        %977 = vmatpush.msra.mxu0 0.0
        %978 = vmatpush.msra.mxu0 0.0
        %979 = vmatpush.msra.mxu0 0.0
        %980 = vmatpush.msra.mxu0 0.0
        %981 = vmatpush.msra.mxu0 0.0
        %982 = vmatpush.msra.mxu0 0.0
        %983 = vmatpush.msra.mxu0 0.0
        %984 = vmatpush.msra.mxu0 0.0
        %985 = vmatpush.msra.mxu0 0.0
        %986 = vmatpush.msra.mxu0 0.0
        %987 = vmatpush.msra.mxu0 0.0
        %988 = vmatpush.msra.mxu0 0.0
        %989 = vmatpush.msra.mxu0 %v926
        %990 = vmatpush.msra.mxu0 %v925
        %991 = vmatmul.f32.gmra.mxu0 %v328
        %v992 = vpop.f32.mrf.mxu0
        %v993 = vadd.f32 0.0, %v992
        %994 = vmatmul.f32.gmra.mxu0 %v331
        %v995 = vpop.f32.mrf.mxu0
        %v996 = vadd.f32 0.0, %v995
        %997 = vdwg.mxu0
        %998 = vmatpush.msra.mxu0 0.0
        %999 = vmatpush.msra.mxu0 0.0
        %1000 = vmatpush.msra.mxu0 0.0
        %1001 = vmatpush.msra.mxu0 0.0
        %1002 = vmatpush.msra.mxu0 0.0
        %1003 = vmatpush.msra.mxu0 0.0
        %1004 = vmatpush.msra.mxu0 0.0
        %1005 = vmatpush.msra.mxu0 0.0
        %1006 = vmatpush.msra.mxu0 0.0
        %1007 = vmatpush.msra.mxu0 0.0
        %1008 = vmatpush.msra.mxu0 0.0
        %1009 = vmatpush.msra.mxu0 0.0
        %1010 = vmatpush.msra.mxu0 0.0
        %1011 = vmatpush.msra.mxu0 0.0
        %1012 = vmatpush.msra.mxu0 %v928
        %1013 = vmatpush.msra.mxu0 %v927
        %1014 = vmatmul.f32.gmra.mxu0 %v328
        %v1015 = vpop.f32.mrf.mxu0
        %v1016 = vadd.f32 0.0, %v1015
        %1017 = vmatmul.f32.gmra.mxu0 %v331
        %v1018 = vpop.f32.mrf.mxu0
        %v1019 = vadd.f32 0.0, %v1018
        %1020 = vdwg.mxu0
        %1021 = vmatpush.msra.mxu0 %v309
        %1022 = vmatpush.msra.mxu0 %v308
        %1023 = vmatpush.msra.mxu0 %v307
        %1024 = vmatpush.msra.mxu0 %v306
        %1025 = vmatpush.msra.mxu0 %v305
        %1026 = vmatpush.msra.mxu0 %v304
        %1027 = vmatpush.msra.mxu0 %v303
        %1028 = vmatpush.msra.mxu0 %v302
        %1029 = vmatpush.msra.mxu0 %v301
        %1030 = vmatpush.msra.mxu0 %v300
        %1031 = vmatpush.msra.mxu0 %v299
        %1032 = vmatpush.msra.mxu0 %v298
        %1033 = vmatpush.msra.mxu0 %v297
        %1034 = vmatpush.msra.mxu0 %v296
        %1035 = vmatpush.msra.mxu0 %v295
        %1036 = vmatpush.msra.mxu0 %v294
        %1037 = vmatmul.f32.gmra.mxu0 %v947
        %v1038 = vpop.f32.mrf.mxu0
        %v1039 = vadd.f32 0.0, %v1038
        %1040 = vmatmul.f32.gmra.mxu0 %v950
        %v1041 = vpop.f32.mrf.mxu0
        %v1042 = vadd.f32 0.0, %v1041
        %1043 = vmatmul.f32.gmra.mxu0 %v970
        %v1044 = vpop.f32.mrf.mxu0
        %v1045 = vadd.f32 0.0, %v1044
        %1046 = vmatmul.f32.gmra.mxu0 %v973
        %v1047 = vpop.f32.mrf.mxu0
        %v1048 = vadd.f32 0.0, %v1047
        %1049 = vmatmul.f32.gmra.mxu0 %v993
        %v1050 = vpop.f32.mrf.mxu0
        %v1051 = vadd.f32 0.0, %v1050
        %1052 = vmatmul.f32.gmra.mxu0 %v996
        %v1053 = vpop.f32.mrf.mxu0
        %v1054 = vadd.f32 0.0, %v1053
        %1055 = vmatmul.f32.gmra.mxu0 %v1016
        %v1056 = vpop.f32.mrf.mxu0
        %v1057 = vadd.f32 0.0, %v1056
        %1058 = vmatmul.f32.gmra.mxu0 %v1019
        %v1059 = vpop.f32.mrf.mxu0
        %v1060 = vadd.f32 0.0, %v1059
        %1061 = vdwg.mxu0
        %v1062 = vsub.f32 %v1039, %v615
        %v1063 = vsub.f32 %v1042, %v616
        %v1064 = vsub.f32 %v1045, %v617
        %v1065 = vsub.f32 %v1048, %v618
        %v1066 = vsub.f32 %v1051, %v619
        %v1067 = vsub.f32 %v1054, %v620
        %v1068 = vsub.f32 %v1057, %v621
        %v1069 = vsub.f32 %v1060, %v622
        %v1070 = vmul.f32 %v615, 2.0
        %v1071 = vmul.f32 %v616, 2.0
        %v1072 = vmul.f32 %v617, 2.0
        %v1073 = vmul.f32 %v618, 2.0
        %v1074 = vmul.f32 %v619, 2.0
        %v1075 = vmul.f32 %v620, 2.0
        %v1076 = vmul.f32 %v621, 2.0
        %v1077 = vmul.f32 %v622, 2.0
        %v1078 = vadd.f32 %v1070, 0.0001
        %v1079 = vadd.f32 %v1071, 0.0001
        %v1080 = vadd.f32 %v1072, 0.0001
        %v1081 = vadd.f32 %v1073, 0.0001
        %v1082 = vadd.f32 %v1074, 0.0001
        %v1083 = vadd.f32 %v1075, 0.0001
        %v1084 = vadd.f32 %v1076, 0.0001
        %v1085 = vadd.f32 %v1077, 0.0001
        %v1086 = vmul.f32 %v1062, 2.0
        %v1087 = vmul.f32 %v1063, 2.0
        %v1088 = vmul.f32 %v1064, 2.0
        %v1089 = vmul.f32 %v1065, 2.0
        %v1090 = vmul.f32 %v1066, 2.0
        %v1091 = vmul.f32 %v1067, 2.0
        %v1092 = vmul.f32 %v1068, 2.0
        %v1093 = vmul.f32 %v1069, 2.0
        %v1094 = vadd.f32 %v1086, 0.0009
        %v1095 = vadd.f32 %v1087, 0.0009
        %v1096 = vadd.f32 %v1088, 0.0009
        %v1097 = vadd.f32 %v1089, 0.0009
        %v1098 = vadd.f32 %v1090, 0.0009
        %v1099 = vadd.f32 %v1091, 0.0009
        %v1100 = vadd.f32 %v1092, 0.0009
        %v1101 = vadd.f32 %v1093, 0.0009
        %v1102 = vmul.f32 %v1078, %v1094
        %v1103 = vmul.f32 %v1079, %v1095
        %v1104 = vmul.f32 %v1080, %v1096
        %v1105 = vmul.f32 %v1081, %v1097
        %v1106 = vmul.f32 %v1082, %v1098
        %v1107 = vmul.f32 %v1083, %v1099
        %v1108 = vmul.f32 %v1084, %v1100
        %v1109 = vmul.f32 %v1085, %v1101
        %v1110 = vadd.f32 %v599, %v607
        %v1111 = vadd.f32 %v600, %v608
        %v1112 = vadd.f32 %v601, %v609
        %v1113 = vadd.f32 %v602, %v610
        %v1114 = vadd.f32 %v603, %v611
        %v1115 = vadd.f32 %v604, %v612
        %v1116 = vadd.f32 %v605, %v613
        %v1117 = vadd.f32 %v606, %v614
        %v1118 = vadd.f32 %v1110, 0.0001
        %v1119 = vadd.f32 %v1111, 0.0001
        %v1120 = vadd.f32 %v1112, 0.0001
        %v1121 = vadd.f32 %v1113, 0.0001
        %v1122 = vadd.f32 %v1114, 0.0001
        %v1123 = vadd.f32 %v1115, 0.0001
        %v1124 = vadd.f32 %v1116, 0.0001
        %v1125 = vadd.f32 %v1117, 0.0001
        %v1126 = vadd.f32 %v764, %v913
        %v1127 = vadd.f32 %v765, %v914
        %v1128 = vadd.f32 %v766, %v915
        %v1129 = vadd.f32 %v767, %v916
        %v1130 = vadd.f32 %v768, %v917
        %v1131 = vadd.f32 %v769, %v918
        %v1132 = vadd.f32 %v770, %v919
        %v1133 = vadd.f32 %v771, %v920
        %v1134 = vadd.f32 %v1126, 0.0009
        %v1135 = vadd.f32 %v1127, 0.0009
        %v1136 = vadd.f32 %v1128, 0.0009
        %v1137 = vadd.f32 %v1129, 0.0009
        %v1138 = vadd.f32 %v1130, 0.0009
        %v1139 = vadd.f32 %v1131, 0.0009
        %v1140 = vadd.f32 %v1132, 0.0009
        %v1141 = vadd.f32 %v1133, 0.0009
        %v1142 = vmul.f32 %v1118, %v1134
        %v1143 = vmul.f32 %v1119, %v1135
        %v1144 = vmul.f32 %v1120, %v1136
        %v1145 = vmul.f32 %v1121, %v1137
        %v1146 = vmul.f32 %v1122, %v1138
        %v1147 = vmul.f32 %v1123, %v1139
        %v1148 = vmul.f32 %v1124, %v1140
        %v1149 = vmul.f32 %v1125, %v1141
        %v1150 = vrcp.pop %v1142
        %v1151 = vmul.f32 %v1142, %v1150
        %v1152 = vsub.f32 1.0, %v1151
        %v1153 = vmul.f32 %v1150, %v1152
        %v1154 = vadd.f32 %v1150, %v1153
        %vm1155 = vweird.f32 %v1142
        %vm1156 = vweird.f32 %v1150
        %vm1157 = vmor %vm1155, %vm1156
        %v1158 = vsel %vm1157, %v1150, %v1154
        %v1159 = vand.u32 2147483647, %v1142
        %vm1160 = vcmp.eq.f32.partialorder %v1159, 8.507059e+37
        %v1161 = vand.u32 %v1142, 2147483648
        %v1162 = vor.u32 1.1754944e-38, %v1161
        %v1163 = vsel %vm1160, %v1162, %v1158
        %v1164 = vrcp.pop %v1143
        %v1165 = vmul.f32 %v1143, %v1164
        %v1166 = vsub.f32 1.0, %v1165
        %v1167 = vmul.f32 %v1164, %v1166
        %v1168 = vadd.f32 %v1164, %v1167
        %vm1169 = vweird.f32 %v1143
        %vm1170 = vweird.f32 %v1164
        %vm1171 = vmor %vm1169, %vm1170
        %v1172 = vsel %vm1171, %v1164, %v1168
        %v1173 = vand.u32 2147483647, %v1143
        %vm1174 = vcmp.eq.f32.partialorder %v1173, 8.507059e+37
        %v1175 = vand.u32 %v1143, 2147483648
        %v1176 = vor.u32 1.1754944e-38, %v1175
        %v1177 = vsel %vm1174, %v1176, %v1172
        %v1178 = vrcp.pop %v1144
        %v1179 = vmul.f32 %v1144, %v1178
        %v1180 = vsub.f32 1.0, %v1179
        %v1181 = vmul.f32 %v1178, %v1180
        %v1182 = vadd.f32 %v1178, %v1181
        %vm1183 = vweird.f32 %v1144
        %vm1184 = vweird.f32 %v1178
        %vm1185 = vmor %vm1183, %vm1184
        %v1186 = vsel %vm1185, %v1178, %v1182
        %v1187 = vand.u32 2147483647, %v1144
        %vm1188 = vcmp.eq.f32.partialorder %v1187, 8.507059e+37
        %v1189 = vand.u32 %v1144, 2147483648
        %v1190 = vor.u32 1.1754944e-38, %v1189
        %v1191 = vsel %vm1188, %v1190, %v1186
        %v1192 = vrcp.pop %v1145
        %v1193 = vmul.f32 %v1145, %v1192
        %v1194 = vsub.f32 1.0, %v1193
        %v1195 = vmul.f32 %v1192, %v1194
        %v1196 = vadd.f32 %v1192, %v1195
        %vm1197 = vweird.f32 %v1145
        %vm1198 = vweird.f32 %v1192
        %vm1199 = vmor %vm1197, %vm1198
        %v1200 = vsel %vm1199, %v1192, %v1196
        %v1201 = vand.u32 2147483647, %v1145
        %vm1202 = vcmp.eq.f32.partialorder %v1201, 8.507059e+37
        %v1203 = vand.u32 %v1145, 2147483648
        %v1204 = vor.u32 1.1754944e-38, %v1203
        %v1205 = vsel %vm1202, %v1204, %v1200
        %v1206 = vrcp.pop %v1146
        %v1207 = vmul.f32 %v1146, %v1206
        %v1208 = vsub.f32 1.0, %v1207
        %v1209 = vmul.f32 %v1206, %v1208
        %v1210 = vadd.f32 %v1206, %v1209
        %vm1211 = vweird.f32 %v1146
        %vm1212 = vweird.f32 %v1206
        %vm1213 = vmor %vm1211, %vm1212
        %v1214 = vsel %vm1213, %v1206, %v1210
        %v1215 = vand.u32 2147483647, %v1146
        %vm1216 = vcmp.eq.f32.partialorder %v1215, 8.507059e+37
        %v1217 = vand.u32 %v1146, 2147483648
        %v1218 = vor.u32 1.1754944e-38, %v1217
        %v1219 = vsel %vm1216, %v1218, %v1214
        %v1220 = vrcp.pop %v1147
        %v1221 = vmul.f32 %v1147, %v1220
        %v1222 = vsub.f32 1.0, %v1221
        %v1223 = vmul.f32 %v1220, %v1222
        %v1224 = vadd.f32 %v1220, %v1223
        %vm1225 = vweird.f32 %v1147
        %vm1226 = vweird.f32 %v1220
        %vm1227 = vmor %vm1225, %vm1226
        %v1228 = vsel %vm1227, %v1220, %v1224
        %v1229 = vand.u32 2147483647, %v1147
        %vm1230 = vcmp.eq.f32.partialorder %v1229, 8.507059e+37
        %v1231 = vand.u32 %v1147, 2147483648
        %v1232 = vor.u32 1.1754944e-38, %v1231
        %v1233 = vsel %vm1230, %v1232, %v1228
        %v1234 = vrcp.pop %v1148
        %v1235 = vmul.f32 %v1148, %v1234
        %v1236 = vsub.f32 1.0, %v1235
        %v1237 = vmul.f32 %v1234, %v1236
        %v1238 = vadd.f32 %v1234, %v1237
        %vm1239 = vweird.f32 %v1148
        %vm1240 = vweird.f32 %v1234
        %vm1241 = vmor %vm1239, %vm1240
        %v1242 = vsel %vm1241, %v1234, %v1238
        %v1243 = vand.u32 2147483647, %v1148
        %vm1244 = vcmp.eq.f32.partialorder %v1243, 8.507059e+37
        %v1245 = vand.u32 %v1148, 2147483648
        %v1246 = vor.u32 1.1754944e-38, %v1245
        %v1247 = vsel %vm1244, %v1246, %v1242
        %v1248 = vrcp.pop %v1149
        %v1249 = vmul.f32 %v1149, %v1248
        %v1250 = vsub.f32 1.0, %v1249
        %v1251 = vmul.f32 %v1248, %v1250
        %v1252 = vadd.f32 %v1248, %v1251
        %vm1253 = vweird.f32 %v1149
        %vm1254 = vweird.f32 %v1248
        %vm1255 = vmor %vm1253, %vm1254
        %v1256 = vsel %vm1255, %v1248, %v1252
        %v1257 = vand.u32 2147483647, %v1149
        %vm1258 = vcmp.eq.f32.partialorder %v1257, 8.507059e+37
        %v1259 = vand.u32 %v1149, 2147483648
        %v1260 = vor.u32 1.1754944e-38, %v1259
        %v1261 = vsel %vm1258, %v1260, %v1256
        %v1262 = vmul.f32 %v1102, %v1163
        %v1263 = vmul.f32 %v1103, %v1177
        %v1264 = vmul.f32 %v1104, %v1191
        %v1265 = vmul.f32 %v1105, %v1205
        %v1266 = vmul.f32 %v1106, %v1219
        %v1267 = vmul.f32 %v1107, %v1233
        %v1268 = vmul.f32 %v1108, %v1247
        %v1269 = vmul.f32 %v1109, %v1261
        %v1270 = vlaneseq
        %v1271 = vand.u32 %v1270, 127
        %vm1272 = vcmp.lt.s32.totalorder %v1271, 16
        %v1273 = vsel %vm1272, %v1262, 0.0
        %v1274 = vsel %vm1272, %v1263, 0.0
        %v1275 = vsel %vm1272, %v1264, 0.0
        %v1276 = vsel %vm1272, %v1265, 0.0
        %v1277 = vsel %vm1272, %v1266, 0.0
        %v1278 = vsel %vm1272, %v1267, 0.0
        %v1279 = vsel %vm1272, %v1268, 0.0
        %v1280 = vsel %vm1272, %v1269, 0.0
        %1281 = vadd.xlane.f32.xlu0 %v1273
        %v1282 = vpop.xlane.xlu0 %1281
        %1283 = vadd.xlane.f32.xlu0 %v1274
        %v1284 = vpop.xlane.xlu0 %1283
        %1285 = vadd.xlane.f32.xlu0 %v1275
        %v1286 = vpop.xlane.xlu0 %1285
        %1287 = vadd.xlane.f32.xlu0 %v1276
        %v1288 = vpop.xlane.xlu0 %1287
        %1289 = vadd.xlane.f32.xlu0 %v1277
        %v1290 = vpop.xlane.xlu0 %1289
        %1291 = vadd.xlane.f32.xlu0 %v1278
        %v1292 = vpop.xlane.xlu0 %1291
        %1293 = vadd.xlane.f32.xlu0 %v1279
        %v1294 = vpop.xlane.xlu0 %1293
        %1295 = vadd.xlane.f32.xlu0 %v1280
        %v1296 = vpop.xlane.xlu0 %1295
        %vm1297 = vcmp.eq.s32.totalorder %v1271, 0
        %vm1298 = vcmp.eq.s32.totalorder %v1271, 1
        %vm1299 = vcmp.eq.s32.totalorder %v1271, 2
        %vm1300 = vcmp.eq.s32.totalorder %v1271, 3
        %v1301 = vsel %vm1297, %v1282, 0.0
        %v1302 = vsel %vm1297, %v1284, 0.0
        %v1303 = vsel %vm1298, %v1286, 0.0
        %v1304 = vsel %vm1298, %v1288, 0.0
        %v1305 = vsel %vm1299, %v1290, 0.0
        %v1306 = vsel %vm1299, %v1292, 0.0
        %v1307 = vsel %vm1300, %v1294, 0.0
        %v1308 = vsel %vm1300, %v1296, 0.0
        %v1309 = vadd.f32 %v1301, %v1302
        %v1310 = vrot.slane %v1309, 4
        %v1311 = vadd.f32 %v1309, %v1310
        %v1312 = vrot.slane %v1311, 2
        %v1313 = vadd.f32 %v1311, %v1312
        %v1314 = vrot.slane %v1313, 1
        %v1315 = vadd.f32 %v1313, %v1314
        %v1316 = vadd.f32 %v1303, %v1304
        %v1317 = vrot.slane %v1316, 4
        %v1318 = vadd.f32 %v1316, %v1317
        %v1319 = vrot.slane %v1318, 2
        %v1320 = vadd.f32 %v1318, %v1319
        %v1321 = vrot.slane %v1320, 1
        %v1322 = vadd.f32 %v1320, %v1321
        %v1323 = vadd.f32 %v1305, %v1306
        %v1324 = vrot.slane %v1323, 4
        %v1325 = vadd.f32 %v1323, %v1324
        %v1326 = vrot.slane %v1325, 2
        %v1327 = vadd.f32 %v1325, %v1326
        %v1328 = vrot.slane %v1327, 1
        %v1329 = vadd.f32 %v1327, %v1328
        %v1330 = vadd.f32 %v1307, %v1308
        %v1331 = vrot.slane %v1330, 4
        %v1332 = vadd.f32 %v1330, %v1331
        %v1333 = vrot.slane %v1332, 2
        %v1334 = vadd.f32 %v1332, %v1333
        %v1335 = vrot.slane %v1334, 1
        %v1336 = vadd.f32 %v1334, %v1335
        %v1337 = vadd.f32 %v1315, %v1322
        %v1338 = vadd.f32 %v1337, %v1329
        %v1339 = vadd.f32 %v1338, %v1336
        %v1340 = vmul.f32 %v1339, 0.00390625
        %1341 = vst [vmem:[%s289] sm:$0xff] %v1340
        %s1342 = sand.u32 %s122, 1
        %s1343 = scalar_lea.sflag [#allocation4], %s1342
        %s1344 = sand.u32 %s122, 1
        %s1345 = smul.addr %s1344, 8
        %s1346 = scalar_lea.vmem [#allocation9], %s1345
        // Predicated region
        $region53: #{tpu_custom_call.1} parent=35 // pred_check
          %p1347 = pneg %p132
        $region54: #{tpu_custom_call.1} parent=35 // pred_check_branch
          %1349 = sbr.rel (%p1347) target = $region56
        $region55: #{tpu_custom_call.1} parent=35 // pred_region
          %1351 = vsyncadd %s1343, 0
          %s1352 = smul.addr %s20, 8
          %s1353 = scalar_lea.hbm %s4, %s1352
          %s1355 = sshll.u32 %s1346, 4
          %s1356 = int_to_ptr.vmem [resolvable:$true] %s1355
          %s1357 = sshll.u32 %s1353, 4
          %s1358 = int_to_ptr.hbm [resolvable:$true] %s1357
          %1360 = dma.vmem_to_hbm [thread:$0]  %s1356, 128, %s1358, %s1343
        $region56: #{tpu_custom_call.1} parent=35 // pred_fallthru
          _
      $region36: #{tpu_custom_call.1} parent=5 // pred_fallthru
        _
      %p1361 = scmp.le.s32.totalorder 2, %s15
      // Predicated region
      $region57: #{tpu_custom_call.1} parent=5 // pred_check
        %p1362 = pneg %p1361
      $region58: #{tpu_custom_call.1} parent=5 // pred_check_branch
        %1364 = sbr.rel (%p1362) target = $region60
      $region59: #{tpu_custom_call.1} parent=5 // pred_region
        %s1365 = ssub.s32 %s15, 2
        // Predicated region
        $region61: #{tpu_custom_call.1} parent=59 // pred_check
          %p1366 = pneg %p138
        $region62: #{tpu_custom_call.1} parent=59 // pred_check_branch
          %1368 = sbr.rel (%p1366) target = $region64
        $region63: #{tpu_custom_call.1} parent=59 // pred_region
          %s1369 = sand.u32 %s123, 1
          %s1370 = scalar_lea.sflag [#allocation4], %s1369
          %s1371 = sand.u32 %s123, 1
          %s1372 = smul.addr %s1371, 8
          %s1373 = scalar_lea.vmem [#allocation9], %s1372
          %1375 = dma.done %s1370, 128
        $region64: #{tpu_custom_call.1} parent=59 // pred_fallthru
          _
      $region60: #{tpu_custom_call.1} parent=5 // pred_fallthru
        _
    $region6: #{tpu_custom_call.1} parent=1 // loop_footer
      %s19 = sadd.s32 1, %s15
    $region7: #{tpu_custom_call.1} parent=1 // loop_footer_branch
      %14 = sbr.rel target = $region3
    $region8: #{tpu_custom_call.1} parent=1 // loop_exit
      _
    %1376 = vsyncpa [#allocation3], 1
    %s1377 = scalar_lea.sflag [#allocation3], 1
    %1378 = vsyncpa %s1377, 1
    %1379 = vsyncpa [#allocation6], 1
    %1380 = vsyncpa [#allocation4], 1
    %s1381 = scalar_lea.sflag [#allocation4], 1
    %1382 = vsyncpa %s1381, 1

</llo_original>
